<compile_context>
chip_gen: v5e
topology: v5e:2x2
jax: 0.10.0
libtpu: 0.0.40
codegen_flags: <defaults>
</compile_context>

<pallas_src>
import functools

import jax
import jax.numpy as jnp
from jax import lax
from jax.experimental import pallas as pl
from jax.experimental.pallas import tpu as pltpu

LN_EPS = 1e-5  # torch.nn.LayerNorm default


def _bert_embeddings_kernel(TM, H,
                            ids_ref, tt_ref,               # scalar-prefetch (SMEM)
                            tok_hbm,                       # (V, H) word table in HBM
                            pos_ref,                       # (TM, H) contiguous pos rows
                            typ_ref,                       # (T, H) resident type table
                            gamma_ref, beta_ref,           # (1, H) LN params (resident)
                            out_ref,                       # (TM, H) output tile
                            tok_buf,                       # (2, TM, H) gather scratch
                            typ_rows,                      # (TM, H) type-row scratch
                            sems):                         # (2,) DMA semaphores
    b = pl.program_id(0)
    s = pl.program_id(1)
    n_s = pl.num_programs(1)
    slot = s % 2

    def issue_gather(bb, ss, slot_):
        # TM small row-DMAs from the HBM word-embedding table into VMEM scratch.
        base = ss * TM
        for r in range(TM):                      # TM is a small static constant
            tok_id = ids_ref[bb, base + r]
            pltpu.make_async_copy(tok_hbm.at[tok_id],
                                  tok_buf.at[slot_, r],
                                  sems.at[slot_]).start()

    # Prime the pipeline at the start of every batch row (works under megacore
    # sharding of the batch axis, since each core still starts each row at s==0).
    @pl.when(s == 0)
    def _():
        issue_gather(b, s, slot)

    # Prefetch the next tile of this row into the other buffer slot so its
    # gathers overlap this tile's compute and writeback.
    @pl.when(s + 1 < n_s)
    def _():
        issue_gather(b, s + 1, 1 - slot)

    # Wait for the current tile's TM row copies (one row-sized wait per copy).
    for r in range(TM):
        pltpu.make_async_copy(tok_hbm.at[0], tok_buf.at[slot, r],
                              sems.at[slot]).wait()

    # Token-type embeddings: dynamic row reads from the VMEM-resident table.
    base = s * TM
    for r in range(TM):
        tt_id = tt_ref[b, base + r]
        typ_rows[pl.ds(r, 1), :] = typ_ref[pl.ds(tt_id, 1), :]

    # Sum of the three embeddings for this (TM, H) tile.
    x = tok_buf[slot] + pos_ref[...] + typ_rows[...]        # (TM, H) f32

    # LayerNorm over the hidden dim (biased variance, like torch).
    mean = jnp.mean(x, axis=-1, keepdims=True)
    xc = x - mean
    var = jnp.mean(xc * xc, axis=-1, keepdims=True)
    inv = lax.rsqrt(var + LN_EPS)
    y = xc * inv * gamma_ref[...] + beta_ref[...]

    # TODO(synk): training-mode dropout (pltpu.prng_random_bits) not applied;
    # eval-mode identity here.
    out_ref[...] = y.astype(out_ref.dtype)


def bert_embeddings(input_ids, token_type_ids, params, position_ids=None,
                    tile_tokens=8):
    """Pallas BertEmbeddings forward (eval mode).

    input_ids, token_type_ids: (B, S) int32
    params: dict with token_emb (V,H), pos_emb (P,H), type_emb (T,H),
            gamma (H,), beta (H,)
    Returns: (B, S, H) float32
    """
    # TODO(synk): caller-supplied position_ids not supported; default 0..S-1.
    assert position_ids is None, "custom position_ids not supported"

    B, S = input_ids.shape
    V, H = params["token_emb"].shape
    T = params["type_emb"].shape[0]
    TM = tile_tokens
    assert TM % 8 == 0, "token tile must be a multiple of 8 (sublane tiling)"
    assert S % TM == 0, "sequence length must be a multiple of the token tile"
    assert S <= params["pos_emb"].shape[0], "seq length exceeds max positions"
    n_s = S // TM

    ids = input_ids.astype(jnp.int32)
    if token_type_ids is None:
        token_type_ids = jnp.zeros_like(ids)
    tt = token_type_ids.astype(jnp.int32)

    tok_tab = params["token_emb"].astype(jnp.float32)
    pos_tab = params["pos_emb"].astype(jnp.float32)
    typ_tab = params["type_emb"].astype(jnp.float32)
    gamma2d = params["gamma"].reshape(1, H).astype(jnp.float32)
    beta2d = params["beta"].reshape(1, H).astype(jnp.float32)

    kernel = functools.partial(_bert_embeddings_kernel, TM, H)

    grid_spec = pltpu.PrefetchScalarGridSpec(
        num_scalar_prefetch=2,           # ids, token_type_ids -> SMEM
        grid=(B, n_s),
        in_specs=[
            pl.BlockSpec(memory_space=pl.ANY),                          # word table (HBM)
            pl.BlockSpec((TM, H), lambda b, s, ids, tt: (s, 0)),        # pos rows (contig)
            pl.BlockSpec((T, H), lambda b, s, ids, tt: (0, 0)),         # type table (resident)
            pl.BlockSpec((1, H), lambda b, s, ids, tt: (0, 0)),         # gamma (resident)
            pl.BlockSpec((1, H), lambda b, s, ids, tt: (0, 0)),         # beta (resident)
        ],
        out_specs=pl.BlockSpec((TM, H), lambda b, s, ids, tt: (b * n_s + s, 0)),
        scratch_shapes=[
            pltpu.VMEM((2, TM, H), jnp.float32),   # double-buffered word-emb gather
            pltpu.VMEM((TM, H), jnp.float32),      # token-type rows for this tile
            pltpu.SemaphoreType.DMA((2,)),         # one DMA sem per buffer slot
        ],
    )

    out_flat = pl.pallas_call(
        kernel,
        out_shape=jax.ShapeDtypeStruct((B * S, H), jnp.float32),
        grid_spec=grid_spec,
        compiler_params=pltpu.CompilerParams(
            dimension_semantics=("parallel", "arbitrary")),
    )(ids, tt, tok_tab, pos_tab, typ_tab, gamma2d, beta2d)

    return out_flat.reshape(B, S, H)


def bert_embeddings_ref(input_ids, token_type_ids, params):
    """Pure-JAX reference mirroring the PyTorch forward (eval mode)."""
    B, S = input_ids.shape
    pos_ids = jnp.broadcast_to(jnp.arange(S, dtype=jnp.int32), (B, S))
    x = (params["token_emb"][input_ids]
         + params["pos_emb"][pos_ids]
         + params["type_emb"][token_type_ids])
    mean = jnp.mean(x, axis=-1, keepdims=True)
    var = jnp.mean((x - mean) ** 2, axis=-1, keepdims=True)
    y = (x - mean) * lax.rsqrt(var + LN_EPS)
    return y * params["gamma"] + params["beta"]


if __name__ == "__main__":
    # Small, module-consistent shapes (lane-dense hidden dim, tiled sequence).
    B, S, H = 2, 16, 128
    TM = 8
    VOCAB, MAX_POS, TYPE_VOCAB = 64, 512, 16

    key = jax.random.PRNGKey(0)
    k_tok, k_pos, k_typ, k_g, k_b, k_ids, k_tt = jax.random.split(key, 7)

    params = {
        "token_emb": (0.02 * jax.random.normal(k_tok, (VOCAB, H))).astype(jnp.float32),
        "pos_emb":   (0.02 * jax.random.normal(k_pos, (MAX_POS, H))).astype(jnp.float32),
        "type_emb":  (0.02 * jax.random.normal(k_typ, (TYPE_VOCAB, H))).astype(jnp.float32),
        "gamma": (1.0 + 0.1 * jax.random.normal(k_g, (H,))).astype(jnp.float32),
        "beta":  (0.1 * jax.random.normal(k_b, (H,))).astype(jnp.float32),
    }

    input_ids = jax.random.randint(k_ids, (B, S), 0, VOCAB, dtype=jnp.int32)
    token_type_ids = jax.random.randint(k_tt, (B, S), 0, TYPE_VOCAB, dtype=jnp.int32)

    out = bert_embeddings(input_ids, token_type_ids, params, tile_tokens=TM)
    out = jax.block_until_ready(out)

    ref = bert_embeddings_ref(input_ids, token_type_ids, params)
    assert out.shape == (B, S, H)
    assert jnp.allclose(out, ref, atol=1e-4, rtol=1e-4), "mismatch vs reference"

    print("KERNEL_OK")
</pallas_src>

<mosaic_0001>
module attributes {stable_mosaic.version = 11 : i64} {
  func.func @_bert_embeddings_kernel(%arg0: i32, %arg1: i32, %arg2: memref<2x16xi32, #tpu.memory_space<smem>>, %arg3: memref<2x16xi32, #tpu.memory_space<smem>>, %arg4: memref<64x128xf32, #tpu.memory_space<any>>, %arg5: memref<8x128xf32, #tpu.memory_space<vmem>>, %arg6: memref<16x128xf32, #tpu.memory_space<vmem>>, %arg7: memref<1x128xf32, #tpu.memory_space<vmem>>, %arg8: memref<1x128xf32, #tpu.memory_space<vmem>>, %arg9: memref<8x128xf32, #tpu.memory_space<vmem>>, %arg10: memref<2x8x128xf32, #tpu.memory_space<vmem>>, %arg11: memref<8x128xf32, #tpu.memory_space<vmem>>, %arg12: memref<2x!tpu.dma_semaphore, #tpu.memory_space<semaphore_mem>>) attributes {dimension_semantics = [#tpu.dimension_semantics<parallel>, #tpu.dimension_semantics<arbitrary>], iteration_bounds = array<i64: 2, 2>, scalar_prefetch = 2 : i64, scratch_operands = 3 : i64, tpu.core_type = #tpu.core_type<tc>, window_params = [{}, {transform_indices = @transform_1, window_bounds = array<i64: 8, 128>}, {pipeline_mode = #tpu.pipeline_mode<synchronous>, transform_indices = @transform_2, window_bounds = array<i64: 16, 128>}, {pipeline_mode = #tpu.pipeline_mode<synchronous>, transform_indices = @transform_3, window_bounds = array<i64: 1, 128>}, {pipeline_mode = #tpu.pipeline_mode<synchronous>, transform_indices = @transform_4, window_bounds = array<i64: 1, 128>}, {transform_indices = @transform_5, window_bounds = array<i64: 8, 128>}]} {
    %c2_i32 = arith.constant 2 : i32
    %c0_i32 = arith.constant 0 : i32
    %0 = arith.cmpi eq, %c2_i32, %c0_i32 : i32
    %c1_i32 = arith.constant 1 : i32
    %1 = arith.select %0, %c1_i32, %c2_i32 : i32
    %2 = arith.remsi %arg1, %1 : i32
    %c0_i32_0 = arith.constant 0 : i32
    %3 = arith.cmpi ne, %2, %c0_i32_0 : i32
    %c0_i32_1 = arith.constant 0 : i32
    %4 = arith.cmpi slt, %2, %c0_i32_1 : i32
    %c0_i32_2 = arith.constant 0 : i32
    %5 = arith.cmpi slt, %1, %c0_i32_2 : i32
    %6 = arith.xori %4, %5 : i1
    %7 = arith.andi %6, %3 : i1
    %8 = arith.addi %2, %1 : i32
    %9 = arith.select %7, %8, %2 : i32
    %c0_i32_3 = arith.constant 0 : i32
    %10 = arith.cmpi eq, %arg1, %c0_i32_3 : i32
    %11 = arith.extui %10 : i1 to i32
    %c0_i32_4 = arith.constant 0 : i32
    %12 = arith.cmpi ne, %11, %c0_i32_4 : i32
    scf.if %12 {
      %c8_i32_75 = arith.constant 8 : i32
      %152 = arith.muli %arg1, %c8_i32_75 : i32
      %c0_i32_76 = arith.constant 0 : i32
      %153 = arith.addi %152, %c0_i32_76 : i32
      %154 = arith.index_cast %arg0 : i32 to index
      %155 = arith.index_cast %153 : i32 to index
      %156 = memref.load %arg2[%154, %155] : memref<2x16xi32, #tpu.memory_space<smem>>
      %c0_i32_77 = arith.constant 0 : i32
      %c0_i32_78 = arith.constant 0 : i32
      %157 = tpu.memref_slice %arg4[%156, %c0_i32_78] : memref<64x128xf32, #tpu.memory_space<any>> -> memref<1x128xf32, #tpu.memory_space<any>>
      %158 = tpu.memref_squeeze %157 : memref<1x128xf32, #tpu.memory_space<any>> -> memref<128xf32, #tpu.memory_space<any>>
      %c0_i32_79 = arith.constant 0 : i32
      %159 = tpu.memref_slice %arg10[%9, %c0_i32_77, %c0_i32_79] : memref<2x8x128xf32, #tpu.memory_space<vmem>> -> memref<1x1x128xf32, #tpu.memory_space<vmem>>
      %160 = tpu.memref_squeeze %159 : memref<1x1x128xf32, #tpu.memory_space<vmem>> -> memref<128xf32, #tpu.memory_space<vmem>>
      %161 = tpu.memref_slice %arg12[%9] : memref<2x!tpu.dma_semaphore, #tpu.memory_space<semaphore_mem>> -> memref<1x!tpu.dma_semaphore, #tpu.memory_space<semaphore_mem>>
      %162 = tpu.memref_squeeze %161 : memref<1x!tpu.dma_semaphore, #tpu.memory_space<semaphore_mem>> -> memref<!tpu.dma_semaphore, #tpu.memory_space<semaphore_mem>>
      tpu.enqueue_dma source(%158 : memref<128xf32, #tpu.memory_space<any>>) target(%160 : memref<128xf32, #tpu.memory_space<vmem>>) target_semaphore(%162 : memref<!tpu.dma_semaphore, #tpu.memory_space<semaphore_mem>>)
      %c1_i32_80 = arith.constant 1 : i32
      %163 = arith.addi %152, %c1_i32_80 : i32
      %164 = arith.index_cast %arg0 : i32 to index
      %165 = arith.index_cast %163 : i32 to index
      %166 = memref.load %arg2[%164, %165] : memref<2x16xi32, #tpu.memory_space<smem>>
      %c1_i32_81 = arith.constant 1 : i32
      %c0_i32_82 = arith.constant 0 : i32
      %167 = tpu.memref_slice %arg4[%166, %c0_i32_82] : memref<64x128xf32, #tpu.memory_space<any>> -> memref<1x128xf32, #tpu.memory_space<any>>
      %168 = tpu.memref_squeeze %167 : memref<1x128xf32, #tpu.memory_space<any>> -> memref<128xf32, #tpu.memory_space<any>>
      %c0_i32_83 = arith.constant 0 : i32
      %169 = tpu.memref_slice %arg10[%9, %c1_i32_81, %c0_i32_83] : memref<2x8x128xf32, #tpu.memory_space<vmem>> -> memref<1x1x128xf32, #tpu.memory_space<vmem>>
      %170 = tpu.memref_squeeze %169 : memref<1x1x128xf32, #tpu.memory_space<vmem>> -> memref<128xf32, #tpu.memory_space<vmem>>
      %171 = tpu.memref_slice %arg12[%9] : memref<2x!tpu.dma_semaphore, #tpu.memory_space<semaphore_mem>> -> memref<1x!tpu.dma_semaphore, #tpu.memory_space<semaphore_mem>>
      %172 = tpu.memref_squeeze %171 : memref<1x!tpu.dma_semaphore, #tpu.memory_space<semaphore_mem>> -> memref<!tpu.dma_semaphore, #tpu.memory_space<semaphore_mem>>
      tpu.enqueue_dma source(%168 : memref<128xf32, #tpu.memory_space<any>>) target(%170 : memref<128xf32, #tpu.memory_space<vmem>>) target_semaphore(%172 : memref<!tpu.dma_semaphore, #tpu.memory_space<semaphore_mem>>)
      %c2_i32_84 = arith.constant 2 : i32
      %173 = arith.addi %152, %c2_i32_84 : i32
      %174 = arith.index_cast %arg0 : i32 to index
      %175 = arith.index_cast %173 : i32 to index
      %176 = memref.load %arg2[%174, %175] : memref<2x16xi32, #tpu.memory_space<smem>>
      %c2_i32_85 = arith.constant 2 : i32
      %c0_i32_86 = arith.constant 0 : i32
      %177 = tpu.memref_slice %arg4[%176, %c0_i32_86] : memref<64x128xf32, #tpu.memory_space<any>> -> memref<1x128xf32, #tpu.memory_space<any>>
      %178 = tpu.memref_squeeze %177 : memref<1x128xf32, #tpu.memory_space<any>> -> memref<128xf32, #tpu.memory_space<any>>
      %c0_i32_87 = arith.constant 0 : i32
      %179 = tpu.memref_slice %arg10[%9, %c2_i32_85, %c0_i32_87] : memref<2x8x128xf32, #tpu.memory_space<vmem>> -> memref<1x1x128xf32, #tpu.memory_space<vmem>>
      %180 = tpu.memref_squeeze %179 : memref<1x1x128xf32, #tpu.memory_space<vmem>> -> memref<128xf32, #tpu.memory_space<vmem>>
      %181 = tpu.memref_slice %arg12[%9] : memref<2x!tpu.dma_semaphore, #tpu.memory_space<semaphore_mem>> -> memref<1x!tpu.dma_semaphore, #tpu.memory_space<semaphore_mem>>
      %182 = tpu.memref_squeeze %181 : memref<1x!tpu.dma_semaphore, #tpu.memory_space<semaphore_mem>> -> memref<!tpu.dma_semaphore, #tpu.memory_space<semaphore_mem>>
      tpu.enqueue_dma source(%178 : memref<128xf32, #tpu.memory_space<any>>) target(%180 : memref<128xf32, #tpu.memory_space<vmem>>) target_semaphore(%182 : memref<!tpu.dma_semaphore, #tpu.memory_space<semaphore_mem>>)
      %c3_i32_88 = arith.constant 3 : i32
      %183 = arith.addi %152, %c3_i32_88 : i32
      %184 = arith.index_cast %arg0 : i32 to index
      %185 = arith.index_cast %183 : i32 to index
      %186 = memref.load %arg2[%184, %185] : memref<2x16xi32, #tpu.memory_space<smem>>
      %c3_i32_89 = arith.constant 3 : i32
      %c0_i32_90 = arith.constant 0 : i32
      %187 = tpu.memref_slice %arg4[%186, %c0_i32_90] : memref<64x128xf32, #tpu.memory_space<any>> -> memref<1x128xf32, #tpu.memory_space<any>>
      %188 = tpu.memref_squeeze %187 : memref<1x128xf32, #tpu.memory_space<any>> -> memref<128xf32, #tpu.memory_space<any>>
      %c0_i32_91 = arith.constant 0 : i32
      %189 = tpu.memref_slice %arg10[%9, %c3_i32_89, %c0_i32_91] : memref<2x8x128xf32, #tpu.memory_space<vmem>> -> memref<1x1x128xf32, #tpu.memory_space<vmem>>
      %190 = tpu.memref_squeeze %189 : memref<1x1x128xf32, #tpu.memory_space<vmem>> -> memref<128xf32, #tpu.memory_space<vmem>>
      %191 = tpu.memref_slice %arg12[%9] : memref<2x!tpu.dma_semaphore, #tpu.memory_space<semaphore_mem>> -> memref<1x!tpu.dma_semaphore, #tpu.memory_space<semaphore_mem>>
      %192 = tpu.memref_squeeze %191 : memref<1x!tpu.dma_semaphore, #tpu.memory_space<semaphore_mem>> -> memref<!tpu.dma_semaphore, #tpu.memory_space<semaphore_mem>>
      tpu.enqueue_dma source(%188 : memref<128xf32, #tpu.memory_space<any>>) target(%190 : memref<128xf32, #tpu.memory_space<vmem>>) target_semaphore(%192 : memref<!tpu.dma_semaphore, #tpu.memory_space<semaphore_mem>>)
      %c4_i32_92 = arith.constant 4 : i32
      %193 = arith.addi %152, %c4_i32_92 : i32
      %194 = arith.index_cast %arg0 : i32 to index
      %195 = arith.index_cast %193 : i32 to index
      %196 = memref.load %arg2[%194, %195] : memref<2x16xi32, #tpu.memory_space<smem>>
      %c4_i32_93 = arith.constant 4 : i32
      %c0_i32_94 = arith.constant 0 : i32
      %197 = tpu.memref_slice %arg4[%196, %c0_i32_94] : memref<64x128xf32, #tpu.memory_space<any>> -> memref<1x128xf32, #tpu.memory_space<any>>
      %198 = tpu.memref_squeeze %197 : memref<1x128xf32, #tpu.memory_space<any>> -> memref<128xf32, #tpu.memory_space<any>>
      %c0_i32_95 = arith.constant 0 : i32
      %199 = tpu.memref_slice %arg10[%9, %c4_i32_93, %c0_i32_95] : memref<2x8x128xf32, #tpu.memory_space<vmem>> -> memref<1x1x128xf32, #tpu.memory_space<vmem>>
      %200 = tpu.memref_squeeze %199 : memref<1x1x128xf32, #tpu.memory_space<vmem>> -> memref<128xf32, #tpu.memory_space<vmem>>
      %201 = tpu.memref_slice %arg12[%9] : memref<2x!tpu.dma_semaphore, #tpu.memory_space<semaphore_mem>> -> memref<1x!tpu.dma_semaphore, #tpu.memory_space<semaphore_mem>>
      %202 = tpu.memref_squeeze %201 : memref<1x!tpu.dma_semaphore, #tpu.memory_space<semaphore_mem>> -> memref<!tpu.dma_semaphore, #tpu.memory_space<semaphore_mem>>
      tpu.enqueue_dma source(%198 : memref<128xf32, #tpu.memory_space<any>>) target(%200 : memref<128xf32, #tpu.memory_space<vmem>>) target_semaphore(%202 : memref<!tpu.dma_semaphore, #tpu.memory_space<semaphore_mem>>)
      %c5_i32_96 = arith.constant 5 : i32
      %203 = arith.addi %152, %c5_i32_96 : i32
      %204 = arith.index_cast %arg0 : i32 to index
      %205 = arith.index_cast %203 : i32 to index
      %206 = memref.load %arg2[%204, %205] : memref<2x16xi32, #tpu.memory_space<smem>>
      %c5_i32_97 = arith.constant 5 : i32
      %c0_i32_98 = arith.constant 0 : i32
      %207 = tpu.memref_slice %arg4[%206, %c0_i32_98] : memref<64x128xf32, #tpu.memory_space<any>> -> memref<1x128xf32, #tpu.memory_space<any>>
      %208 = tpu.memref_squeeze %207 : memref<1x128xf32, #tpu.memory_space<any>> -> memref<128xf32, #tpu.memory_space<any>>
      %c0_i32_99 = arith.constant 0 : i32
      %209 = tpu.memref_slice %arg10[%9, %c5_i32_97, %c0_i32_99] : memref<2x8x128xf32, #tpu.memory_space<vmem>> -> memref<1x1x128xf32, #tpu.memory_space<vmem>>
      %210 = tpu.memref_squeeze %209 : memref<1x1x128xf32, #tpu.memory_space<vmem>> -> memref<128xf32, #tpu.memory_space<vmem>>
      %211 = tpu.memref_slice %arg12[%9] : memref<2x!tpu.dma_semaphore, #tpu.memory_space<semaphore_mem>> -> memref<1x!tpu.dma_semaphore, #tpu.memory_space<semaphore_mem>>
      %212 = tpu.memref_squeeze %211 : memref<1x!tpu.dma_semaphore, #tpu.memory_space<semaphore_mem>> -> memref<!tpu.dma_semaphore, #tpu.memory_space<semaphore_mem>>
      tpu.enqueue_dma source(%208 : memref<128xf32, #tpu.memory_space<any>>) target(%210 : memref<128xf32, #tpu.memory_space<vmem>>) target_semaphore(%212 : memref<!tpu.dma_semaphore, #tpu.memory_space<semaphore_mem>>)
      %c6_i32_100 = arith.constant 6 : i32
      %213 = arith.addi %152, %c6_i32_100 : i32
      %214 = arith.index_cast %arg0 : i32 to index
      %215 = arith.index_cast %213 : i32 to index
      %216 = memref.load %arg2[%214, %215] : memref<2x16xi32, #tpu.memory_space<smem>>
      %c6_i32_101 = arith.constant 6 : i32
      %c0_i32_102 = arith.constant 0 : i32
      %217 = tpu.memref_slice %arg4[%216, %c0_i32_102] : memref<64x128xf32, #tpu.memory_space<any>> -> memref<1x128xf32, #tpu.memory_space<any>>
      %218 = tpu.memref_squeeze %217 : memref<1x128xf32, #tpu.memory_space<any>> -> memref<128xf32, #tpu.memory_space<any>>
      %c0_i32_103 = arith.constant 0 : i32
      %219 = tpu.memref_slice %arg10[%9, %c6_i32_101, %c0_i32_103] : memref<2x8x128xf32, #tpu.memory_space<vmem>> -> memref<1x1x128xf32, #tpu.memory_space<vmem>>
      %220 = tpu.memref_squeeze %219 : memref<1x1x128xf32, #tpu.memory_space<vmem>> -> memref<128xf32, #tpu.memory_space<vmem>>
      %221 = tpu.memref_slice %arg12[%9] : memref<2x!tpu.dma_semaphore, #tpu.memory_space<semaphore_mem>> -> memref<1x!tpu.dma_semaphore, #tpu.memory_space<semaphore_mem>>
      %222 = tpu.memref_squeeze %221 : memref<1x!tpu.dma_semaphore, #tpu.memory_space<semaphore_mem>> -> memref<!tpu.dma_semaphore, #tpu.memory_space<semaphore_mem>>
      tpu.enqueue_dma source(%218 : memref<128xf32, #tpu.memory_space<any>>) target(%220 : memref<128xf32, #tpu.memory_space<vmem>>) target_semaphore(%222 : memref<!tpu.dma_semaphore, #tpu.memory_space<semaphore_mem>>)
      %c7_i32_104 = arith.constant 7 : i32
      %223 = arith.addi %152, %c7_i32_104 : i32
      %224 = arith.index_cast %arg0 : i32 to index
      %225 = arith.index_cast %223 : i32 to index
      %226 = memref.load %arg2[%224, %225] : memref<2x16xi32, #tpu.memory_space<smem>>
      %c7_i32_105 = arith.constant 7 : i32
      %c0_i32_106 = arith.constant 0 : i32
      %227 = tpu.memref_slice %arg4[%226, %c0_i32_106] : memref<64x128xf32, #tpu.memory_space<any>> -> memref<1x128xf32, #tpu.memory_space<any>>
      %228 = tpu.memref_squeeze %227 : memref<1x128xf32, #tpu.memory_space<any>> -> memref<128xf32, #tpu.memory_space<any>>
      %c0_i32_107 = arith.constant 0 : i32
      %229 = tpu.memref_slice %arg10[%9, %c7_i32_105, %c0_i32_107] : memref<2x8x128xf32, #tpu.memory_space<vmem>> -> memref<1x1x128xf32, #tpu.memory_space<vmem>>
      %230 = tpu.memref_squeeze %229 : memref<1x1x128xf32, #tpu.memory_space<vmem>> -> memref<128xf32, #tpu.memory_space<vmem>>
      %231 = tpu.memref_slice %arg12[%9] : memref<2x!tpu.dma_semaphore, #tpu.memory_space<semaphore_mem>> -> memref<1x!tpu.dma_semaphore, #tpu.memory_space<semaphore_mem>>
      %232 = tpu.memref_squeeze %231 : memref<1x!tpu.dma_semaphore, #tpu.memory_space<semaphore_mem>> -> memref<!tpu.dma_semaphore, #tpu.memory_space<semaphore_mem>>
      tpu.enqueue_dma source(%228 : memref<128xf32, #tpu.memory_space<any>>) target(%230 : memref<128xf32, #tpu.memory_space<vmem>>) target_semaphore(%232 : memref<!tpu.dma_semaphore, #tpu.memory_space<semaphore_mem>>)
    } else {
    }
    %c1_i32_5 = arith.constant 1 : i32
    %13 = arith.addi %arg1, %c1_i32_5 : i32
    %c2_i32_6 = arith.constant 2 : i32
    %14 = arith.cmpi slt, %13, %c2_i32_6 : i32
    %15 = arith.extui %14 : i1 to i32
    %c0_i32_7 = arith.constant 0 : i32
    %16 = arith.cmpi ne, %15, %c0_i32_7 : i32
    scf.if %16 {
      %c1_i32_75 = arith.constant 1 : i32
      %152 = arith.addi %arg1, %c1_i32_75 : i32
      %c1_i32_76 = arith.constant 1 : i32
      %153 = arith.subi %c1_i32_76, %9 : i32
      %c8_i32_77 = arith.constant 8 : i32
      %154 = arith.muli %152, %c8_i32_77 : i32
      %c0_i32_78 = arith.constant 0 : i32
      %155 = arith.addi %154, %c0_i32_78 : i32
      %156 = arith.index_cast %arg0 : i32 to index
      %157 = arith.index_cast %155 : i32 to index
      %158 = memref.load %arg2[%156, %157] : memref<2x16xi32, #tpu.memory_space<smem>>
      %c0_i32_79 = arith.constant 0 : i32
      %c0_i32_80 = arith.constant 0 : i32
      %159 = tpu.memref_slice %arg4[%158, %c0_i32_80] : memref<64x128xf32, #tpu.memory_space<any>> -> memref<1x128xf32, #tpu.memory_space<any>>
      %160 = tpu.memref_squeeze %159 : memref<1x128xf32, #tpu.memory_space<any>> -> memref<128xf32, #tpu.memory_space<any>>
      %c0_i32_81 = arith.constant 0 : i32
      %161 = tpu.memref_slice %arg10[%153, %c0_i32_79, %c0_i32_81] : memref<2x8x128xf32, #tpu.memory_space<vmem>> -> memref<1x1x128xf32, #tpu.memory_space<vmem>>
      %162 = tpu.memref_squeeze %161 : memref<1x1x128xf32, #tpu.memory_space<vmem>> -> memref<128xf32, #tpu.memory_space<vmem>>
      %163 = tpu.memref_slice %arg12[%153] : memref<2x!tpu.dma_semaphore, #tpu.memory_space<semaphore_mem>> -> memref<1x!tpu.dma_semaphore, #tpu.memory_space<semaphore_mem>>
      %164 = tpu.memref_squeeze %163 : memref<1x!tpu.dma_semaphore, #tpu.memory_space<semaphore_mem>> -> memref<!tpu.dma_semaphore, #tpu.memory_space<semaphore_mem>>
      tpu.enqueue_dma source(%160 : memref<128xf32, #tpu.memory_space<any>>) target(%162 : memref<128xf32, #tpu.memory_space<vmem>>) target_semaphore(%164 : memref<!tpu.dma_semaphore, #tpu.memory_space<semaphore_mem>>)
      %c1_i32_82 = arith.constant 1 : i32
      %165 = arith.addi %154, %c1_i32_82 : i32
      %166 = arith.index_cast %arg0 : i32 to index
      %167 = arith.index_cast %165 : i32 to index
      %168 = memref.load %arg2[%166, %167] : memref<2x16xi32, #tpu.memory_space<smem>>
      %c1_i32_83 = arith.constant 1 : i32
      %c0_i32_84 = arith.constant 0 : i32
      %169 = tpu.memref_slice %arg4[%168, %c0_i32_84] : memref<64x128xf32, #tpu.memory_space<any>> -> memref<1x128xf32, #tpu.memory_space<any>>
      %170 = tpu.memref_squeeze %169 : memref<1x128xf32, #tpu.memory_space<any>> -> memref<128xf32, #tpu.memory_space<any>>
      %c0_i32_85 = arith.constant 0 : i32
      %171 = tpu.memref_slice %arg10[%153, %c1_i32_83, %c0_i32_85] : memref<2x8x128xf32, #tpu.memory_space<vmem>> -> memref<1x1x128xf32, #tpu.memory_space<vmem>>
      %172 = tpu.memref_squeeze %171 : memref<1x1x128xf32, #tpu.memory_space<vmem>> -> memref<128xf32, #tpu.memory_space<vmem>>
      %173 = tpu.memref_slice %arg12[%153] : memref<2x!tpu.dma_semaphore, #tpu.memory_space<semaphore_mem>> -> memref<1x!tpu.dma_semaphore, #tpu.memory_space<semaphore_mem>>
      %174 = tpu.memref_squeeze %173 : memref<1x!tpu.dma_semaphore, #tpu.memory_space<semaphore_mem>> -> memref<!tpu.dma_semaphore, #tpu.memory_space<semaphore_mem>>
      tpu.enqueue_dma source(%170 : memref<128xf32, #tpu.memory_space<any>>) target(%172 : memref<128xf32, #tpu.memory_space<vmem>>) target_semaphore(%174 : memref<!tpu.dma_semaphore, #tpu.memory_space<semaphore_mem>>)
      %c2_i32_86 = arith.constant 2 : i32
      %175 = arith.addi %154, %c2_i32_86 : i32
      %176 = arith.index_cast %arg0 : i32 to index
      %177 = arith.index_cast %175 : i32 to index
      %178 = memref.load %arg2[%176, %177] : memref<2x16xi32, #tpu.memory_space<smem>>
      %c2_i32_87 = arith.constant 2 : i32
      %c0_i32_88 = arith.constant 0 : i32
      %179 = tpu.memref_slice %arg4[%178, %c0_i32_88] : memref<64x128xf32, #tpu.memory_space<any>> -> memref<1x128xf32, #tpu.memory_space<any>>
      %180 = tpu.memref_squeeze %179 : memref<1x128xf32, #tpu.memory_space<any>> -> memref<128xf32, #tpu.memory_space<any>>
      %c0_i32_89 = arith.constant 0 : i32
      %181 = tpu.memref_slice %arg10[%153, %c2_i32_87, %c0_i32_89] : memref<2x8x128xf32, #tpu.memory_space<vmem>> -> memref<1x1x128xf32, #tpu.memory_space<vmem>>
      %182 = tpu.memref_squeeze %181 : memref<1x1x128xf32, #tpu.memory_space<vmem>> -> memref<128xf32, #tpu.memory_space<vmem>>
      %183 = tpu.memref_slice %arg12[%153] : memref<2x!tpu.dma_semaphore, #tpu.memory_space<semaphore_mem>> -> memref<1x!tpu.dma_semaphore, #tpu.memory_space<semaphore_mem>>
      %184 = tpu.memref_squeeze %183 : memref<1x!tpu.dma_semaphore, #tpu.memory_space<semaphore_mem>> -> memref<!tpu.dma_semaphore, #tpu.memory_space<semaphore_mem>>
      tpu.enqueue_dma source(%180 : memref<128xf32, #tpu.memory_space<any>>) target(%182 : memref<128xf32, #tpu.memory_space<vmem>>) target_semaphore(%184 : memref<!tpu.dma_semaphore, #tpu.memory_space<semaphore_mem>>)
      %c3_i32_90 = arith.constant 3 : i32
      %185 = arith.addi %154, %c3_i32_90 : i32
      %186 = arith.index_cast %arg0 : i32 to index
      %187 = arith.index_cast %185 : i32 to index
      %188 = memref.load %arg2[%186, %187] : memref<2x16xi32, #tpu.memory_space<smem>>
      %c3_i32_91 = arith.constant 3 : i32
      %c0_i32_92 = arith.constant 0 : i32
      %189 = tpu.memref_slice %arg4[%188, %c0_i32_92] : memref<64x128xf32, #tpu.memory_space<any>> -> memref<1x128xf32, #tpu.memory_space<any>>
      %190 = tpu.memref_squeeze %189 : memref<1x128xf32, #tpu.memory_space<any>> -> memref<128xf32, #tpu.memory_space<any>>
      %c0_i32_93 = arith.constant 0 : i32
      %191 = tpu.memref_slice %arg10[%153, %c3_i32_91, %c0_i32_93] : memref<2x8x128xf32, #tpu.memory_space<vmem>> -> memref<1x1x128xf32, #tpu.memory_space<vmem>>
      %192 = tpu.memref_squeeze %191 : memref<1x1x128xf32, #tpu.memory_space<vmem>> -> memref<128xf32, #tpu.memory_space<vmem>>
      %193 = tpu.memref_slice %arg12[%153] : memref<2x!tpu.dma_semaphore, #tpu.memory_space<semaphore_mem>> -> memref<1x!tpu.dma_semaphore, #tpu.memory_space<semaphore_mem>>
      %194 = tpu.memref_squeeze %193 : memref<1x!tpu.dma_semaphore, #tpu.memory_space<semaphore_mem>> -> memref<!tpu.dma_semaphore, #tpu.memory_space<semaphore_mem>>
      tpu.enqueue_dma source(%190 : memref<128xf32, #tpu.memory_space<any>>) target(%192 : memref<128xf32, #tpu.memory_space<vmem>>) target_semaphore(%194 : memref<!tpu.dma_semaphore, #tpu.memory_space<semaphore_mem>>)
      %c4_i32_94 = arith.constant 4 : i32
      %195 = arith.addi %154, %c4_i32_94 : i32
      %196 = arith.index_cast %arg0 : i32 to index
      %197 = arith.index_cast %195 : i32 to index
      %198 = memref.load %arg2[%196, %197] : memref<2x16xi32, #tpu.memory_space<smem>>
      %c4_i32_95 = arith.constant 4 : i32
      %c0_i32_96 = arith.constant 0 : i32
      %199 = tpu.memref_slice %arg4[%198, %c0_i32_96] : memref<64x128xf32, #tpu.memory_space<any>> -> memref<1x128xf32, #tpu.memory_space<any>>
      %200 = tpu.memref_squeeze %199 : memref<1x128xf32, #tpu.memory_space<any>> -> memref<128xf32, #tpu.memory_space<any>>
      %c0_i32_97 = arith.constant 0 : i32
      %201 = tpu.memref_slice %arg10[%153, %c4_i32_95, %c0_i32_97] : memref<2x8x128xf32, #tpu.memory_space<vmem>> -> memref<1x1x128xf32, #tpu.memory_space<vmem>>
      %202 = tpu.memref_squeeze %201 : memref<1x1x128xf32, #tpu.memory_space<vmem>> -> memref<128xf32, #tpu.memory_space<vmem>>
      %203 = tpu.memref_slice %arg12[%153] : memref<2x!tpu.dma_semaphore, #tpu.memory_space<semaphore_mem>> -> memref<1x!tpu.dma_semaphore, #tpu.memory_space<semaphore_mem>>
      %204 = tpu.memref_squeeze %203 : memref<1x!tpu.dma_semaphore, #tpu.memory_space<semaphore_mem>> -> memref<!tpu.dma_semaphore, #tpu.memory_space<semaphore_mem>>
      tpu.enqueue_dma source(%200 : memref<128xf32, #tpu.memory_space<any>>) target(%202 : memref<128xf32, #tpu.memory_space<vmem>>) target_semaphore(%204 : memref<!tpu.dma_semaphore, #tpu.memory_space<semaphore_mem>>)
      %c5_i32_98 = arith.constant 5 : i32
      %205 = arith.addi %154, %c5_i32_98 : i32
      %206 = arith.index_cast %arg0 : i32 to index
      %207 = arith.index_cast %205 : i32 to index
      %208 = memref.load %arg2[%206, %207] : memref<2x16xi32, #tpu.memory_space<smem>>
      %c5_i32_99 = arith.constant 5 : i32
      %c0_i32_100 = arith.constant 0 : i32
      %209 = tpu.memref_slice %arg4[%208, %c0_i32_100] : memref<64x128xf32, #tpu.memory_space<any>> -> memref<1x128xf32, #tpu.memory_space<any>>
      %210 = tpu.memref_squeeze %209 : memref<1x128xf32, #tpu.memory_space<any>> -> memref<128xf32, #tpu.memory_space<any>>
      %c0_i32_101 = arith.constant 0 : i32
      %211 = tpu.memref_slice %arg10[%153, %c5_i32_99, %c0_i32_101] : memref<2x8x128xf32, #tpu.memory_space<vmem>> -> memref<1x1x128xf32, #tpu.memory_space<vmem>>
      %212 = tpu.memref_squeeze %211 : memref<1x1x128xf32, #tpu.memory_space<vmem>> -> memref<128xf32, #tpu.memory_space<vmem>>
      %213 = tpu.memref_slice %arg12[%153] : memref<2x!tpu.dma_semaphore, #tpu.memory_space<semaphore_mem>> -> memref<1x!tpu.dma_semaphore, #tpu.memory_space<semaphore_mem>>
      %214 = tpu.memref_squeeze %213 : memref<1x!tpu.dma_semaphore, #tpu.memory_space<semaphore_mem>> -> memref<!tpu.dma_semaphore, #tpu.memory_space<semaphore_mem>>
      tpu.enqueue_dma source(%210 : memref<128xf32, #tpu.memory_space<any>>) target(%212 : memref<128xf32, #tpu.memory_space<vmem>>) target_semaphore(%214 : memref<!tpu.dma_semaphore, #tpu.memory_space<semaphore_mem>>)
      %c6_i32_102 = arith.constant 6 : i32
      %215 = arith.addi %154, %c6_i32_102 : i32
      %216 = arith.index_cast %arg0 : i32 to index
      %217 = arith.index_cast %215 : i32 to index
      %218 = memref.load %arg2[%216, %217] : memref<2x16xi32, #tpu.memory_space<smem>>
      %c6_i32_103 = arith.constant 6 : i32
      %c0_i32_104 = arith.constant 0 : i32
      %219 = tpu.memref_slice %arg4[%218, %c0_i32_104] : memref<64x128xf32, #tpu.memory_space<any>> -> memref<1x128xf32, #tpu.memory_space<any>>
      %220 = tpu.memref_squeeze %219 : memref<1x128xf32, #tpu.memory_space<any>> -> memref<128xf32, #tpu.memory_space<any>>
      %c0_i32_105 = arith.constant 0 : i32
      %221 = tpu.memref_slice %arg10[%153, %c6_i32_103, %c0_i32_105] : memref<2x8x128xf32, #tpu.memory_space<vmem>> -> memref<1x1x128xf32, #tpu.memory_space<vmem>>
      %222 = tpu.memref_squeeze %221 : memref<1x1x128xf32, #tpu.memory_space<vmem>> -> memref<128xf32, #tpu.memory_space<vmem>>
      %223 = tpu.memref_slice %arg12[%153] : memref<2x!tpu.dma_semaphore, #tpu.memory_space<semaphore_mem>> -> memref<1x!tpu.dma_semaphore, #tpu.memory_space<semaphore_mem>>
      %224 = tpu.memref_squeeze %223 : memref<1x!tpu.dma_semaphore, #tpu.memory_space<semaphore_mem>> -> memref<!tpu.dma_semaphore, #tpu.memory_space<semaphore_mem>>
      tpu.enqueue_dma source(%220 : memref<128xf32, #tpu.memory_space<any>>) target(%222 : memref<128xf32, #tpu.memory_space<vmem>>) target_semaphore(%224 : memref<!tpu.dma_semaphore, #tpu.memory_space<semaphore_mem>>)
      %c7_i32_106 = arith.constant 7 : i32
      %225 = arith.addi %154, %c7_i32_106 : i32
      %226 = arith.index_cast %arg0 : i32 to index
      %227 = arith.index_cast %225 : i32 to index
      %228 = memref.load %arg2[%226, %227] : memref<2x16xi32, #tpu.memory_space<smem>>
      %c7_i32_107 = arith.constant 7 : i32
      %c0_i32_108 = arith.constant 0 : i32
      %229 = tpu.memref_slice %arg4[%228, %c0_i32_108] : memref<64x128xf32, #tpu.memory_space<any>> -> memref<1x128xf32, #tpu.memory_space<any>>
      %230 = tpu.memref_squeeze %229 : memref<1x128xf32, #tpu.memory_space<any>> -> memref<128xf32, #tpu.memory_space<any>>
      %c0_i32_109 = arith.constant 0 : i32
      %231 = tpu.memref_slice %arg10[%153, %c7_i32_107, %c0_i32_109] : memref<2x8x128xf32, #tpu.memory_space<vmem>> -> memref<1x1x128xf32, #tpu.memory_space<vmem>>
      %232 = tpu.memref_squeeze %231 : memref<1x1x128xf32, #tpu.memory_space<vmem>> -> memref<128xf32, #tpu.memory_space<vmem>>
      %233 = tpu.memref_slice %arg12[%153] : memref<2x!tpu.dma_semaphore, #tpu.memory_space<semaphore_mem>> -> memref<1x!tpu.dma_semaphore, #tpu.memory_space<semaphore_mem>>
      %234 = tpu.memref_squeeze %233 : memref<1x!tpu.dma_semaphore, #tpu.memory_space<semaphore_mem>> -> memref<!tpu.dma_semaphore, #tpu.memory_space<semaphore_mem>>
      tpu.enqueue_dma source(%230 : memref<128xf32, #tpu.memory_space<any>>) target(%232 : memref<128xf32, #tpu.memory_space<vmem>>) target_semaphore(%234 : memref<!tpu.dma_semaphore, #tpu.memory_space<semaphore_mem>>)
    } else {
    }
    %c0_i32_8 = arith.constant 0 : i32
    %c0_i32_9 = arith.constant 0 : i32
    %c0_i32_10 = arith.constant 0 : i32
    %17 = tpu.memref_slice %arg4[%c0_i32_8, %c0_i32_10] : memref<64x128xf32, #tpu.memory_space<any>> -> memref<1x128xf32, #tpu.memory_space<any>>
    %18 = tpu.memref_squeeze %17 : memref<1x128xf32, #tpu.memory_space<any>> -> memref<128xf32, #tpu.memory_space<any>>
    %c0_i32_11 = arith.constant 0 : i32
    %19 = tpu.memref_slice %arg10[%9, %c0_i32_9, %c0_i32_11] : memref<2x8x128xf32, #tpu.memory_space<vmem>> -> memref<1x1x128xf32, #tpu.memory_space<vmem>>
    %20 = tpu.memref_squeeze %19 : memref<1x1x128xf32, #tpu.memory_space<vmem>> -> memref<128xf32, #tpu.memory_space<vmem>>
    %21 = tpu.memref_slice %arg12[%9] : memref<2x!tpu.dma_semaphore, #tpu.memory_space<semaphore_mem>> -> memref<1x!tpu.dma_semaphore, #tpu.memory_space<semaphore_mem>>
    %22 = tpu.memref_squeeze %21 : memref<1x!tpu.dma_semaphore, #tpu.memory_space<semaphore_mem>> -> memref<!tpu.dma_semaphore, #tpu.memory_space<semaphore_mem>>
    tpu.wait_dma2 semaphore(%22 : memref<!tpu.dma_semaphore, #tpu.memory_space<semaphore_mem>>) src(%18 : memref<128xf32, #tpu.memory_space<any>>) dst(%20 : memref<128xf32, #tpu.memory_space<vmem>>)
    %c0_i32_12 = arith.constant 0 : i32
    %c1_i32_13 = arith.constant 1 : i32
    %c0_i32_14 = arith.constant 0 : i32
    %23 = tpu.memref_slice %arg4[%c0_i32_12, %c0_i32_14] : memref<64x128xf32, #tpu.memory_space<any>> -> memref<1x128xf32, #tpu.memory_space<any>>
    %24 = tpu.memref_squeeze %23 : memref<1x128xf32, #tpu.memory_space<any>> -> memref<128xf32, #tpu.memory_space<any>>
    %c0_i32_15 = arith.constant 0 : i32
    %25 = tpu.memref_slice %arg10[%9, %c1_i32_13, %c0_i32_15] : memref<2x8x128xf32, #tpu.memory_space<vmem>> -> memref<1x1x128xf32, #tpu.memory_space<vmem>>
    %26 = tpu.memref_squeeze %25 : memref<1x1x128xf32, #tpu.memory_space<vmem>> -> memref<128xf32, #tpu.memory_space<vmem>>
    %27 = tpu.memref_slice %arg12[%9] : memref<2x!tpu.dma_semaphore, #tpu.memory_space<semaphore_mem>> -> memref<1x!tpu.dma_semaphore, #tpu.memory_space<semaphore_mem>>
    %28 = tpu.memref_squeeze %27 : memref<1x!tpu.dma_semaphore, #tpu.memory_space<semaphore_mem>> -> memref<!tpu.dma_semaphore, #tpu.memory_space<semaphore_mem>>
    tpu.wait_dma2 semaphore(%28 : memref<!tpu.dma_semaphore, #tpu.memory_space<semaphore_mem>>) src(%24 : memref<128xf32, #tpu.memory_space<any>>) dst(%26 : memref<128xf32, #tpu.memory_space<vmem>>)
    %c0_i32_16 = arith.constant 0 : i32
    %c2_i32_17 = arith.constant 2 : i32
    %c0_i32_18 = arith.constant 0 : i32
    %29 = tpu.memref_slice %arg4[%c0_i32_16, %c0_i32_18] : memref<64x128xf32, #tpu.memory_space<any>> -> memref<1x128xf32, #tpu.memory_space<any>>
    %30 = tpu.memref_squeeze %29 : memref<1x128xf32, #tpu.memory_space<any>> -> memref<128xf32, #tpu.memory_space<any>>
    %c0_i32_19 = arith.constant 0 : i32
    %31 = tpu.memref_slice %arg10[%9, %c2_i32_17, %c0_i32_19] : memref<2x8x128xf32, #tpu.memory_space<vmem>> -> memref<1x1x128xf32, #tpu.memory_space<vmem>>
    %32 = tpu.memref_squeeze %31 : memref<1x1x128xf32, #tpu.memory_space<vmem>> -> memref<128xf32, #tpu.memory_space<vmem>>
    %33 = tpu.memref_slice %arg12[%9] : memref<2x!tpu.dma_semaphore, #tpu.memory_space<semaphore_mem>> -> memref<1x!tpu.dma_semaphore, #tpu.memory_space<semaphore_mem>>
    %34 = tpu.memref_squeeze %33 : memref<1x!tpu.dma_semaphore, #tpu.memory_space<semaphore_mem>> -> memref<!tpu.dma_semaphore, #tpu.memory_space<semaphore_mem>>
    tpu.wait_dma2 semaphore(%34 : memref<!tpu.dma_semaphore, #tpu.memory_space<semaphore_mem>>) src(%30 : memref<128xf32, #tpu.memory_space<any>>) dst(%32 : memref<128xf32, #tpu.memory_space<vmem>>)
    %c0_i32_20 = arith.constant 0 : i32
    %c3_i32 = arith.constant 3 : i32
    %c0_i32_21 = arith.constant 0 : i32
    %35 = tpu.memref_slice %arg4[%c0_i32_20, %c0_i32_21] : memref<64x128xf32, #tpu.memory_space<any>> -> memref<1x128xf32, #tpu.memory_space<any>>
    %36 = tpu.memref_squeeze %35 : memref<1x128xf32, #tpu.memory_space<any>> -> memref<128xf32, #tpu.memory_space<any>>
    %c0_i32_22 = arith.constant 0 : i32
    %37 = tpu.memref_slice %arg10[%9, %c3_i32, %c0_i32_22] : memref<2x8x128xf32, #tpu.memory_space<vmem>> -> memref<1x1x128xf32, #tpu.memory_space<vmem>>
    %38 = tpu.memref_squeeze %37 : memref<1x1x128xf32, #tpu.memory_space<vmem>> -> memref<128xf32, #tpu.memory_space<vmem>>
    %39 = tpu.memref_slice %arg12[%9] : memref<2x!tpu.dma_semaphore, #tpu.memory_space<semaphore_mem>> -> memref<1x!tpu.dma_semaphore, #tpu.memory_space<semaphore_mem>>
    %40 = tpu.memref_squeeze %39 : memref<1x!tpu.dma_semaphore, #tpu.memory_space<semaphore_mem>> -> memref<!tpu.dma_semaphore, #tpu.memory_space<semaphore_mem>>
    tpu.wait_dma2 semaphore(%40 : memref<!tpu.dma_semaphore, #tpu.memory_space<semaphore_mem>>) src(%36 : memref<128xf32, #tpu.memory_space<any>>) dst(%38 : memref<128xf32, #tpu.memory_space<vmem>>)
    %c0_i32_23 = arith.constant 0 : i32
    %c4_i32 = arith.constant 4 : i32
    %c0_i32_24 = arith.constant 0 : i32
    %41 = tpu.memref_slice %arg4[%c0_i32_23, %c0_i32_24] : memref<64x128xf32, #tpu.memory_space<any>> -> memref<1x128xf32, #tpu.memory_space<any>>
    %42 = tpu.memref_squeeze %41 : memref<1x128xf32, #tpu.memory_space<any>> -> memref<128xf32, #tpu.memory_space<any>>
    %c0_i32_25 = arith.constant 0 : i32
    %43 = tpu.memref_slice %arg10[%9, %c4_i32, %c0_i32_25] : memref<2x8x128xf32, #tpu.memory_space<vmem>> -> memref<1x1x128xf32, #tpu.memory_space<vmem>>
    %44 = tpu.memref_squeeze %43 : memref<1x1x128xf32, #tpu.memory_space<vmem>> -> memref<128xf32, #tpu.memory_space<vmem>>
    %45 = tpu.memref_slice %arg12[%9] : memref<2x!tpu.dma_semaphore, #tpu.memory_space<semaphore_mem>> -> memref<1x!tpu.dma_semaphore, #tpu.memory_space<semaphore_mem>>
    %46 = tpu.memref_squeeze %45 : memref<1x!tpu.dma_semaphore, #tpu.memory_space<semaphore_mem>> -> memref<!tpu.dma_semaphore, #tpu.memory_space<semaphore_mem>>
    tpu.wait_dma2 semaphore(%46 : memref<!tpu.dma_semaphore, #tpu.memory_space<semaphore_mem>>) src(%42 : memref<128xf32, #tpu.memory_space<any>>) dst(%44 : memref<128xf32, #tpu.memory_space<vmem>>)
    %c0_i32_26 = arith.constant 0 : i32
    %c5_i32 = arith.constant 5 : i32
    %c0_i32_27 = arith.constant 0 : i32
    %47 = tpu.memref_slice %arg4[%c0_i32_26, %c0_i32_27] : memref<64x128xf32, #tpu.memory_space<any>> -> memref<1x128xf32, #tpu.memory_space<any>>
    %48 = tpu.memref_squeeze %47 : memref<1x128xf32, #tpu.memory_space<any>> -> memref<128xf32, #tpu.memory_space<any>>
    %c0_i32_28 = arith.constant 0 : i32
    %49 = tpu.memref_slice %arg10[%9, %c5_i32, %c0_i32_28] : memref<2x8x128xf32, #tpu.memory_space<vmem>> -> memref<1x1x128xf32, #tpu.memory_space<vmem>>
    %50 = tpu.memref_squeeze %49 : memref<1x1x128xf32, #tpu.memory_space<vmem>> -> memref<128xf32, #tpu.memory_space<vmem>>
    %51 = tpu.memref_slice %arg12[%9] : memref<2x!tpu.dma_semaphore, #tpu.memory_space<semaphore_mem>> -> memref<1x!tpu.dma_semaphore, #tpu.memory_space<semaphore_mem>>
    %52 = tpu.memref_squeeze %51 : memref<1x!tpu.dma_semaphore, #tpu.memory_space<semaphore_mem>> -> memref<!tpu.dma_semaphore, #tpu.memory_space<semaphore_mem>>
    tpu.wait_dma2 semaphore(%52 : memref<!tpu.dma_semaphore, #tpu.memory_space<semaphore_mem>>) src(%48 : memref<128xf32, #tpu.memory_space<any>>) dst(%50 : memref<128xf32, #tpu.memory_space<vmem>>)
    %c0_i32_29 = arith.constant 0 : i32
    %c6_i32 = arith.constant 6 : i32
    %c0_i32_30 = arith.constant 0 : i32
    %53 = tpu.memref_slice %arg4[%c0_i32_29, %c0_i32_30] : memref<64x128xf32, #tpu.memory_space<any>> -> memref<1x128xf32, #tpu.memory_space<any>>
    %54 = tpu.memref_squeeze %53 : memref<1x128xf32, #tpu.memory_space<any>> -> memref<128xf32, #tpu.memory_space<any>>
    %c0_i32_31 = arith.constant 0 : i32
    %55 = tpu.memref_slice %arg10[%9, %c6_i32, %c0_i32_31] : memref<2x8x128xf32, #tpu.memory_space<vmem>> -> memref<1x1x128xf32, #tpu.memory_space<vmem>>
    %56 = tpu.memref_squeeze %55 : memref<1x1x128xf32, #tpu.memory_space<vmem>> -> memref<128xf32, #tpu.memory_space<vmem>>
    %57 = tpu.memref_slice %arg12[%9] : memref<2x!tpu.dma_semaphore, #tpu.memory_space<semaphore_mem>> -> memref<1x!tpu.dma_semaphore, #tpu.memory_space<semaphore_mem>>
    %58 = tpu.memref_squeeze %57 : memref<1x!tpu.dma_semaphore, #tpu.memory_space<semaphore_mem>> -> memref<!tpu.dma_semaphore, #tpu.memory_space<semaphore_mem>>
    tpu.wait_dma2 semaphore(%58 : memref<!tpu.dma_semaphore, #tpu.memory_space<semaphore_mem>>) src(%54 : memref<128xf32, #tpu.memory_space<any>>) dst(%56 : memref<128xf32, #tpu.memory_space<vmem>>)
    %c0_i32_32 = arith.constant 0 : i32
    %c7_i32 = arith.constant 7 : i32
    %c0_i32_33 = arith.constant 0 : i32
    %59 = tpu.memref_slice %arg4[%c0_i32_32, %c0_i32_33] : memref<64x128xf32, #tpu.memory_space<any>> -> memref<1x128xf32, #tpu.memory_space<any>>
    %60 = tpu.memref_squeeze %59 : memref<1x128xf32, #tpu.memory_space<any>> -> memref<128xf32, #tpu.memory_space<any>>
    %c0_i32_34 = arith.constant 0 : i32
    %61 = tpu.memref_slice %arg10[%9, %c7_i32, %c0_i32_34] : memref<2x8x128xf32, #tpu.memory_space<vmem>> -> memref<1x1x128xf32, #tpu.memory_space<vmem>>
    %62 = tpu.memref_squeeze %61 : memref<1x1x128xf32, #tpu.memory_space<vmem>> -> memref<128xf32, #tpu.memory_space<vmem>>
    %63 = tpu.memref_slice %arg12[%9] : memref<2x!tpu.dma_semaphore, #tpu.memory_space<semaphore_mem>> -> memref<1x!tpu.dma_semaphore, #tpu.memory_space<semaphore_mem>>
    %64 = tpu.memref_squeeze %63 : memref<1x!tpu.dma_semaphore, #tpu.memory_space<semaphore_mem>> -> memref<!tpu.dma_semaphore, #tpu.memory_space<semaphore_mem>>
    tpu.wait_dma2 semaphore(%64 : memref<!tpu.dma_semaphore, #tpu.memory_space<semaphore_mem>>) src(%60 : memref<128xf32, #tpu.memory_space<any>>) dst(%62 : memref<128xf32, #tpu.memory_space<vmem>>)
    %c8_i32 = arith.constant 8 : i32
    %65 = arith.muli %arg1, %c8_i32 : i32
    %c0_i32_35 = arith.constant 0 : i32
    %66 = arith.addi %65, %c0_i32_35 : i32
    %67 = arith.index_cast %arg0 : i32 to index
    %68 = arith.index_cast %66 : i32 to index
    %69 = memref.load %arg3[%67, %68] : memref<2x16xi32, #tpu.memory_space<smem>>
    %70 = arith.index_cast %69 : i32 to index
    %c0 = arith.constant 0 : index
    %71 = vector.load %arg6[%70, %c0] : memref<16x128xf32, #tpu.memory_space<vmem>>, vector<1x128xf32>
    %c0_36 = arith.constant 0 : index
    %c0_37 = arith.constant 0 : index
    %72 = vector.load %arg11[%c0_36, %c0_37] : memref<8x128xf32, #tpu.memory_space<vmem>>, vector<1x128xf32>
    tpu.vector_store %arg11[%c0_36, %c0_37], %71 {strides = array<i32>} : memref<8x128xf32, #tpu.memory_space<vmem>>, vector<1x128xf32>,
    %c1_i32_38 = arith.constant 1 : i32
    %73 = arith.addi %65, %c1_i32_38 : i32
    %74 = arith.index_cast %arg0 : i32 to index
    %75 = arith.index_cast %73 : i32 to index
    %76 = memref.load %arg3[%74, %75] : memref<2x16xi32, #tpu.memory_space<smem>>
    %77 = arith.index_cast %76 : i32 to index
    %c0_39 = arith.constant 0 : index
    %78 = vector.load %arg6[%77, %c0_39] : memref<16x128xf32, #tpu.memory_space<vmem>>, vector<1x128xf32>
    %c1 = arith.constant 1 : index
    %c0_40 = arith.constant 0 : index
    %79 = vector.load %arg11[%c1, %c0_40] : memref<8x128xf32, #tpu.memory_space<vmem>>, vector<1x128xf32>
    tpu.vector_store %arg11[%c1, %c0_40], %78 {strides = array<i32>} : memref<8x128xf32, #tpu.memory_space<vmem>>, vector<1x128xf32>,
    %c2_i32_41 = arith.constant 2 : i32
    %80 = arith.addi %65, %c2_i32_41 : i32
    %81 = arith.index_cast %arg0 : i32 to index
    %82 = arith.index_cast %80 : i32 to index
    %83 = memref.load %arg3[%81, %82] : memref<2x16xi32, #tpu.memory_space<smem>>
    %84 = arith.index_cast %83 : i32 to index
    %c0_42 = arith.constant 0 : index
    %85 = vector.load %arg6[%84, %c0_42] : memref<16x128xf32, #tpu.memory_space<vmem>>, vector<1x128xf32>
    %c2 = arith.constant 2 : index
    %c0_43 = arith.constant 0 : index
    %86 = vector.load %arg11[%c2, %c0_43] : memref<8x128xf32, #tpu.memory_space<vmem>>, vector<1x128xf32>
    tpu.vector_store %arg11[%c2, %c0_43], %85 {strides = array<i32>} : memref<8x128xf32, #tpu.memory_space<vmem>>, vector<1x128xf32>,
    %c3_i32_44 = arith.constant 3 : i32
    %87 = arith.addi %65, %c3_i32_44 : i32
    %88 = arith.index_cast %arg0 : i32 to index
    %89 = arith.index_cast %87 : i32 to index
    %90 = memref.load %arg3[%88, %89] : memref<2x16xi32, #tpu.memory_space<smem>>
    %91 = arith.index_cast %90 : i32 to index
    %c0_45 = arith.constant 0 : index
    %92 = vector.load %arg6[%91, %c0_45] : memref<16x128xf32, #tpu.memory_space<vmem>>, vector<1x128xf32>
    %c3 = arith.constant 3 : index
    %c0_46 = arith.constant 0 : index
    %93 = vector.load %arg11[%c3, %c0_46] : memref<8x128xf32, #tpu.memory_space<vmem>>, vector<1x128xf32>
    tpu.vector_store %arg11[%c3, %c0_46], %92 {strides = array<i32>} : memref<8x128xf32, #tpu.memory_space<vmem>>, vector<1x128xf32>,
    %c4_i32_47 = arith.constant 4 : i32
    %94 = arith.addi %65, %c4_i32_47 : i32
    %95 = arith.index_cast %arg0 : i32 to index
    %96 = arith.index_cast %94 : i32 to index
    %97 = memref.load %arg3[%95, %96] : memref<2x16xi32, #tpu.memory_space<smem>>
    %98 = arith.index_cast %97 : i32 to index
    %c0_48 = arith.constant 0 : index
    %99 = vector.load %arg6[%98, %c0_48] : memref<16x128xf32, #tpu.memory_space<vmem>>, vector<1x128xf32>
    %c4 = arith.constant 4 : index
    %c0_49 = arith.constant 0 : index
    %100 = vector.load %arg11[%c4, %c0_49] : memref<8x128xf32, #tpu.memory_space<vmem>>, vector<1x128xf32>
    tpu.vector_store %arg11[%c4, %c0_49], %99 {strides = array<i32>} : memref<8x128xf32, #tpu.memory_space<vmem>>, vector<1x128xf32>,
    %c5_i32_50 = arith.constant 5 : i32
    %101 = arith.addi %65, %c5_i32_50 : i32
    %102 = arith.index_cast %arg0 : i32 to index
    %103 = arith.index_cast %101 : i32 to index
    %104 = memref.load %arg3[%102, %103] : memref<2x16xi32, #tpu.memory_space<smem>>
    %105 = arith.index_cast %104 : i32 to index
    %c0_51 = arith.constant 0 : index
    %106 = vector.load %arg6[%105, %c0_51] : memref<16x128xf32, #tpu.memory_space<vmem>>, vector<1x128xf32>
    %c5 = arith.constant 5 : index
    %c0_52 = arith.constant 0 : index
    %107 = vector.load %arg11[%c5, %c0_52] : memref<8x128xf32, #tpu.memory_space<vmem>>, vector<1x128xf32>
    tpu.vector_store %arg11[%c5, %c0_52], %106 {strides = array<i32>} : memref<8x128xf32, #tpu.memory_space<vmem>>, vector<1x128xf32>,
    %c6_i32_53 = arith.constant 6 : i32
    %108 = arith.addi %65, %c6_i32_53 : i32
    %109 = arith.index_cast %arg0 : i32 to index
    %110 = arith.index_cast %108 : i32 to index
    %111 = memref.load %arg3[%109, %110] : memref<2x16xi32, #tpu.memory_space<smem>>
    %112 = arith.index_cast %111 : i32 to index
    %c0_54 = arith.constant 0 : index
    %113 = vector.load %arg6[%112, %c0_54] : memref<16x128xf32, #tpu.memory_space<vmem>>, vector<1x128xf32>
    %c6 = arith.constant 6 : index
    %c0_55 = arith.constant 0 : index
    %114 = vector.load %arg11[%c6, %c0_55] : memref<8x128xf32, #tpu.memory_space<vmem>>, vector<1x128xf32>
    tpu.vector_store %arg11[%c6, %c0_55], %113 {strides = array<i32>} : memref<8x128xf32, #tpu.memory_space<vmem>>, vector<1x128xf32>,
    %c7_i32_56 = arith.constant 7 : i32
    %115 = arith.addi %65, %c7_i32_56 : i32
    %116 = arith.index_cast %arg0 : i32 to index
    %117 = arith.index_cast %115 : i32 to index
    %118 = memref.load %arg3[%116, %117] : memref<2x16xi32, #tpu.memory_space<smem>>
    %119 = arith.index_cast %118 : i32 to index
    %c0_57 = arith.constant 0 : index
    %120 = vector.load %arg6[%119, %c0_57] : memref<16x128xf32, #tpu.memory_space<vmem>>, vector<1x128xf32>
    %c7 = arith.constant 7 : index
    %c0_58 = arith.constant 0 : index
    %121 = vector.load %arg11[%c7, %c0_58] : memref<8x128xf32, #tpu.memory_space<vmem>>, vector<1x128xf32>
    tpu.vector_store %arg11[%c7, %c0_58], %120 {strides = array<i32>} : memref<8x128xf32, #tpu.memory_space<vmem>>, vector<1x128xf32>,
    %122 = arith.index_cast %9 : i32 to index
    %c0_59 = arith.constant 0 : index
    %c0_60 = arith.constant 0 : index
    %123 = vector.load %arg10[%122, %c0_59, %c0_60] : memref<2x8x128xf32, #tpu.memory_space<vmem>>, vector<1x8x128xf32>
    %124 = vector.shape_cast %123 : vector<1x8x128xf32> to vector<8x128xf32>
    %c0_61 = arith.constant 0 : index
    %c0_62 = arith.constant 0 : index
    %125 = vector.load %arg5[%c0_61, %c0_62] : memref<8x128xf32, #tpu.memory_space<vmem>>, vector<8x128xf32>
    %126 = arith.addf %124, %125 : vector<8x128xf32>
    %c0_63 = arith.constant 0 : index
    %c0_64 = arith.constant 0 : index
    %127 = vector.load %arg11[%c0_63, %c0_64] : memref<8x128xf32, #tpu.memory_space<vmem>>, vector<8x128xf32>
    %128 = arith.addf %126, %127 : vector<8x128xf32>
    %cst = arith.constant dense<0.000000e+00> : vector<8xf32>
    %129 = vector.multi_reduction <add>, %128, %cst [1] : vector<8x128xf32> to vector<8xf32>
    %130 = vector.shape_cast %129 : vector<8xf32> to vector<8x1xf32>
    %cst_65 = arith.constant 1.280000e+02 : f32
    %131 = vector.broadcast %cst_65 : f32 to vector<8x1xf32>
    %132 = arith.divf %130, %131 : vector<8x1xf32>
    %133 = vector.broadcast %132 : vector<8x1xf32> to vector<8x128xf32>
    %134 = arith.subf %128, %133 : vector<8x128xf32>
    %135 = arith.mulf %134, %134 : vector<8x128xf32>
    %cst_66 = arith.constant dense<0.000000e+00> : vector<8xf32>
    %136 = vector.multi_reduction <add>, %135, %cst_66 [1] : vector<8x128xf32> to vector<8xf32>
    %137 = vector.shape_cast %136 : vector<8xf32> to vector<8x1xf32>
    %cst_67 = arith.constant 1.280000e+02 : f32
    %138 = vector.broadcast %cst_67 : f32 to vector<8x1xf32>
    %139 = arith.divf %137, %138 : vector<8x1xf32>
    %cst_68 = arith.constant 9.99999974E-6 : f32
    %140 = vector.broadcast %cst_68 : f32 to vector<8x1xf32>
    %141 = arith.addf %139, %140 : vector<8x1xf32>
    %142 = math.rsqrt %141 : vector<8x1xf32>
    %143 = vector.broadcast %142 : vector<8x1xf32> to vector<8x128xf32>
    %144 = arith.mulf %134, %143 : vector<8x128xf32>
    %c0_69 = arith.constant 0 : index
    %c0_70 = arith.constant 0 : index
    %145 = vector.load %arg7[%c0_69, %c0_70] : memref<1x128xf32, #tpu.memory_space<vmem>>, vector<1x128xf32>
    %146 = vector.broadcast %145 : vector<1x128xf32> to vector<8x128xf32>
    %147 = arith.mulf %144, %146 : vector<8x128xf32>
    %c0_71 = arith.constant 0 : index
    %c0_72 = arith.constant 0 : index
    %148 = vector.load %arg8[%c0_71, %c0_72] : memref<1x128xf32, #tpu.memory_space<vmem>>, vector<1x128xf32>
    %149 = vector.broadcast %148 : vector<1x128xf32> to vector<8x128xf32>
    %150 = arith.addf %147, %149 : vector<8x128xf32>
    %c0_73 = arith.constant 0 : index
    %c0_74 = arith.constant 0 : index
    %151 = vector.load %arg9[%c0_73, %c0_74] : memref<8x128xf32, #tpu.memory_space<vmem>>, vector<8x128xf32>
    tpu.vector_store %arg9[%c0_73, %c0_74], %150 {strides = array<i32>} : memref<8x128xf32, #tpu.memory_space<vmem>>, vector<8x128xf32>,
    return
  }
  func.func @transform_1(%arg0: i32, %arg1: i32, %arg2: memref<2x16xi32, #tpu.memory_space<smem>>, %arg3: memref<2x16xi32, #tpu.memory_space<smem>>) -> (i32, i32) {
    %c0_i32 = arith.constant 0 : i32
    %c0_i32_0 = arith.constant 0 : i32
    return %arg1, %c0_i32 : i32, i32
  }
  func.func @transform_2(%arg0: i32, %arg1: i32, %arg2: memref<2x16xi32, #tpu.memory_space<smem>>, %arg3: memref<2x16xi32, #tpu.memory_space<smem>>) -> (i32, i32) {
    %c0_i32 = arith.constant 0 : i32
    %c0_i32_0 = arith.constant 0 : i32
    %c0_i32_1 = arith.constant 0 : i32
    return %c0_i32, %c0_i32_0 : i32, i32
  }
  func.func @transform_3(%arg0: i32, %arg1: i32, %arg2: memref<2x16xi32, #tpu.memory_space<smem>>, %arg3: memref<2x16xi32, #tpu.memory_space<smem>>) -> (i32, i32) {
    %c0_i32 = arith.constant 0 : i32
    %c0_i32_0 = arith.constant 0 : i32
    %c0_i32_1 = arith.constant 0 : i32
    return %c0_i32, %c0_i32_0 : i32, i32
  }
  func.func @transform_4(%arg0: i32, %arg1: i32, %arg2: memref<2x16xi32, #tpu.memory_space<smem>>, %arg3: memref<2x16xi32, #tpu.memory_space<smem>>) -> (i32, i32) {
    %c0_i32 = arith.constant 0 : i32
    %c0_i32_0 = arith.constant 0 : i32
    %c0_i32_1 = arith.constant 0 : i32
    return %c0_i32, %c0_i32_0 : i32, i32
  }
  func.func @transform_5(%arg0: i32, %arg1: i32, %arg2: memref<2x16xi32, #tpu.memory_space<smem>>, %arg3: memref<2x16xi32, #tpu.memory_space<smem>>) -> (i32, i32) {
    %c2_i32 = arith.constant 2 : i32
    %0 = arith.muli %arg0, %c2_i32 : i32
    %1 = arith.addi %0, %arg1 : i32
    %c0_i32 = arith.constant 0 : i32
    %c0_i32_0 = arith.constant 0 : i32
    return %1, %c0_i32 : i32, i32
  }
}

</mosaic_0001>

<llo_original>
// kernel: tpu_custom_call.1
$region0: #{tpu_custom_call.1}
  #allocation0 [shape = 'u32[]', space=smem, size = 0x4, offset = 0x4, fixed_abs, tag = 'smem constant byte address 0x4 - core index']
  #allocation1 [shape = 'u32[72,128]{1,0:T(1,128)}', space=vmem, size = 0x9000, scoped, tag = 'internal scratch']
  #allocation2 [shape = 'f32[2,8,128]{2,1,0:T(8,128)}', space=vmem, size = 0x2000, scoped, tag = 'scratch operand']
  #allocation3 [shape = 'f32[8,128]{1,0:T(8,128)}', space=vmem, size = 0x1000, scoped, tag = 'scratch operand']
  #allocation4 [shape = 's32[2]{0}', space=sflag, size = 0x8, scoped, tag = 'scratch operand']
  #allocation5 [shape = 's32[1]{0}', space=sflag, size = 0x4, scoped, tag = 'scoped memory for tpu_custom_call.1']
  #allocation6 [shape = 'u8[1024]{0}', space=smem, size = 0x400, scoped, tag = 'prefetched SMEM operand 0']
  #allocation7 [shape = 'u8[1024]{0}', space=smem, size = 0x400, scoped, tag = 'prefetched SMEM operand 1']
  #allocation14 [shape = 's32[]', space=sflag, size = 0x4, offset = 0, fixed_abs, tag = 'sflag constant byte address 0x0 - dummy sync flag']
  #allocation15 [shape = 's32[]', space=sflag, size = 0x4, offset = 0, fixed_abs, tag = 'sflag constant byte address 0x0 - dummy sync flag']
  #allocation16 [shape = 'u32[]', space=smem, size = 0x4, offset = 0x44, fixed_abs, tag = 'smem constant byte address 0x44 - assertion arg 0']
  #allocation17 [shape = 'u32[]', space=smem, size = 0x4, offset = 0x48, fixed_abs, tag = 'smem constant byte address 0x48 - assertion arg 1']
  #allocation18 [shape = 's32[]', space=sflag, size = 0x4, offset = 0, fixed_abs, tag = 'sflag constant byte address 0x0 - dummy sync flag']
  #allocation19 [shape = 's32[]', space=sflag, size = 0x4, offset = 0, fixed_abs, tag = 'sflag constant byte address 0x0 - dummy sync flag']
  #allocation20 [shape = 's32[]', space=sflag, size = 0x4, offset = 0, fixed_abs, tag = 'sflag constant byte address 0x0 - dummy sync flag']
  #allocation21 [shape = 's32[]', space=sflag, size = 0x4, offset = 0, fixed_abs, tag = 'sflag constant byte address 0x0 - dummy sync flag']
  #allocation22 [shape = 's32[]', space=sflag, size = 0x4, offset = 0, fixed_abs, tag = 'sflag constant byte address 0x0 - dummy sync flag']
  #allocation23 [shape = 's32[]', space=sflag, size = 0x4, offset = 0, fixed_abs, tag = 'sflag constant byte address 0x0 - dummy sync flag']
  #allocation24 [shape = 's32[]', space=sflag, size = 0x4, offset = 0, fixed_abs, tag = 'sflag constant byte address 0x0 - dummy sync flag']
  #allocation25 [shape = 's32[]', space=sflag, size = 0x4, offset = 0, fixed_abs, tag = 'sflag constant byte address 0x0 - dummy sync flag']
  #allocation26 [shape = 's32[]', space=sflag, size = 0x4, offset = 0, fixed_abs, tag = 'sflag constant byte address 0x0 - dummy sync flag']
  #allocation27 [shape = 's32[]', space=sflag, size = 0x4, offset = 0, fixed_abs, tag = 'sflag constant byte address 0x0 - dummy sync flag']
  #allocation28 [shape = 's32[]', space=sflag, size = 0x4, offset = 0, fixed_abs, tag = 'sflag constant byte address 0x0 - dummy sync flag']
  #allocation29 [shape = 's32[]', space=sflag, size = 0x4, offset = 0, fixed_abs, tag = 'sflag constant byte address 0x0 - dummy sync flag']
  #allocation30 [shape = 's32[]', space=sflag, size = 0x4, offset = 0, fixed_abs, tag = 'sflag constant byte address 0x0 - dummy sync flag']
  #allocation31 [shape = 's32[]', space=sflag, size = 0x4, offset = 0, fixed_abs, tag = 'sflag constant byte address 0x0 - dummy sync flag']
  #allocation32 [shape = 's32[]', space=sflag, size = 0x4, offset = 0, fixed_abs, tag = 'sflag constant byte address 0x0 - dummy sync flag']
  #allocation33 [shape = 's32[]', space=sflag, size = 0x4, offset = 0, fixed_abs, tag = 'sflag constant byte address 0x0 - dummy sync flag']
  #allocation34 [shape = 's32[]', space=sflag, size = 0x4, offset = 0, fixed_abs, tag = 'sflag constant byte address 0x0 - dummy sync flag']
  #allocation35 [shape = 's32[]', space=sflag, size = 0x4, offset = 0, fixed_abs, tag = 'sflag constant byte address 0x0 - dummy sync flag']
  #allocation36 [shape = 's32[]', space=sflag, size = 0x4, offset = 0, fixed_abs, tag = 'sflag constant byte address 0x0 - dummy sync flag']
  #allocation37 [shape = 's32[]', space=sflag, size = 0x4, offset = 0, fixed_abs, tag = 'sflag constant byte address 0x0 - dummy sync flag']
  #allocation38 [shape = 's32[]', space=sflag, size = 0x4, offset = 0, fixed_abs, tag = 'sflag constant byte address 0x0 - dummy sync flag']
  #allocation39 [shape = 's32[]', space=sflag, size = 0x4, offset = 0, fixed_abs, tag = 'sflag constant byte address 0x0 - dummy sync flag']
  #allocation40 [shape = 's32[]', space=sflag, size = 0x4, offset = 0, fixed_abs, tag = 'sflag constant byte address 0x0 - dummy sync flag']
  #allocation41 [shape = 's32[]', space=sflag, size = 0x4, offset = 0, fixed_abs, tag = 'sflag constant byte address 0x0 - dummy sync flag']
  #allocation42 [shape = 's32[]', space=sflag, size = 0x4, offset = 0, fixed_abs, tag = 'sflag constant byte address 0x0 - dummy sync flag']
  #allocation43 [shape = 's32[]', space=sflag, size = 0x4, offset = 0, fixed_abs, tag = 'sflag constant byte address 0x0 - dummy sync flag']
  #allocation44 [shape = 's32[]', space=sflag, size = 0x4, offset = 0, fixed_abs, tag = 'sflag constant byte address 0x0 - dummy sync flag']
  #allocation45 [shape = 's32[]', space=sflag, size = 0x4, offset = 0, fixed_abs, tag = 'sflag constant byte address 0x0 - dummy sync flag']
  #allocation46 [shape = 's32[]', space=sflag, size = 0x4, offset = 0, fixed_abs, tag = 'sflag constant byte address 0x0 - dummy sync flag']
  #allocation47 [shape = 's32[]', space=sflag, size = 0x4, offset = 0, fixed_abs, tag = 'sflag constant byte address 0x0 - dummy sync flag']
  %s0 = inlined_call_operand.hbm [shape: s32[2,16], index: 0, kind: input, shape index: {}]
  %s1 = inlined_call_operand.hbm [shape: s32[2,16], index: 1, kind: input, shape index: {}]
  %s2 = inlined_call_operand.hbm [shape: f32[64,128], index: 2, kind: input, shape index: {}]
  %s3 = inlined_call_operand.hbm [shape: f32[512,128], index: 3, kind: input, shape index: {}]
  %s4 = inlined_call_operand.hbm [shape: f32[16,128], index: 4, kind: input, shape index: {}]
  %s5 = inlined_call_operand.vmem [shape: f32[1,128], index: 5, kind: input, shape index: {}]
  %s6 = inlined_call_operand.vmem [shape: f32[1,128], index: 6, kind: input, shape index: {}]
  %s7 = inlined_call_operand.hbm [shape: f32[32,128], index: 7, kind: output, shape index: {}]
  %s8 = sld [smem:[#allocation0]]
  $region129: #{tpu_custom_call.1} parent=0
    _
  %s10 = ssub.s32 1, %s8
  %s11 = scalar_select 0, %s10, %s8
  %s13 = sshll.u32 %s0, 4
  %s14 = int_to_ptr.hbm [resolvable:$true] %s13
  %16 = dma.hbm_to_smem %s14, 32, [#allocation6], [#allocation5]
  %s18 = sshll.u32 %s1, 4
  %s19 = int_to_ptr.hbm [resolvable:$true] %s18
  %21 = dma.hbm_to_smem %s19, 32, [#allocation7], [#allocation5]
  %23 = dma.done [#allocation5], 64
  %24 = sfence
  $region1: #{tpu_custom_call.1} parent=0
    #allocation8 [shape = 'u8[8192]{0}', space=vmem, size = 0x2000, scoped, tag = 'input window, operand 3']
    #allocation9 [shape = 's32[2]{0}', space=sflag, size = 0x8, scoped, tag = 'scoped memory for tpu_custom_call.1']
    #allocation10 [shape = 's32[2]{0}', space=sflag, size = 0x8, scoped, tag = 'scoped memory for tpu_custom_call.1']
    #allocation11 [shape = 'u8[8192]{0}', space=vmem, size = 0x2000, scoped, tag = 'input window, operand 4, single buffered']
    #allocation12 [shape = 's32[1]{0}', space=sflag, size = 0x4, scoped, tag = 'scoped memory for tpu_custom_call.1']
    #allocation13 [shape = 'u8[8192]{0}', space=vmem, size = 0x2000, scoped, tag = 'output window, operand 0']
    %25 = vsyncpa [#allocation9], 0
    %s26 = scalar_lea.sflag [#allocation9], 1
    %27 = vsyncpa %s26, 0
    %28 = vsyncpa [#allocation12], 0
    %29 = vsyncpa [#allocation10], 0
    %s30 = scalar_lea.sflag [#allocation10], 1
    %31 = vsyncpa %s30, 0
    loop: start=0, step=1, limit=6
    $region2: #{tpu_custom_call.1} parent=1 // loop_pre_header
      _
    $region3: #{tpu_custom_call.1} parent=1 // loop_header
      %s33 = sphi 0, %s37
      %p34 = scmp.ge.s32.totalorder %s33, 6
      %s40 = sphi 0, %s52
      %s41 = sphi 0, %s48
      %s42 = sphi 0, %s40
      %s43 = sphi 0, %s41
      %s44 = sphi 0, %s42
      %s45 = sphi 0, %s43
      %s55 = sphi 0, %s57
      %s58 = sphi 0, %s55
      %s59 = sphi 0, %s58
      %s75 = sphi 0, %s59
      %s79 = sphi 0, %s79
      %s81 = sphi 0, %s79
      %s82 = sphi 0, %s81
      %s96 = sphi 0, %s82
      %s100 = sphi 0, %s100
      %s102 = sphi 0, %s100
      %s103 = sphi 0, %s102
      %s117 = sphi 0, %s103
      %s121 = sphi 0, %s121
      %s123 = sphi 0, %s121
      %s124 = sphi 0, %s123
      %s138 = sphi 0, %s124
      %s148 = sphi 0, %s150
      %s151 = sphi 0, %s148
      %s152 = sphi 0, %s151
      %s168 = sphi 0, %s152
    $region4: #{tpu_custom_call.1} parent=1 // loop_header_branch
      %36 = sbr.rel (%p34) target = $region8
    $region5: #{tpu_custom_call.1} parent=1 // loop_body
      %s38 = ssub.s32 %s33, 1
      %s39 = ssub.s32 %s33, 2
      %s46 = sadd.s32 1, %s41
      %p47 = scmp.ge.s32.totalorder %s46, 2
      %s48 = scalar_select %p47, 0, %s46
      %s49 = sadd.s32 1, %s40
      %s50 = scalar_select %p47, %s49, %s40
      %p51 = scmp.ge.s32.totalorder %s50, 2
      %s52 = scalar_select %p51, 0, %s50
      %s53 = ssub.s32 %s41, %s48
      %p54 = scmp.eq.s32.totalorder %s53, 0
      %s56 = sadd.s32 %s55, 1
      %s57 = scalar_select %p54, %s55, %s56
      %p60 = pneg %p54
      %p61 = scmp.eq.s32.totalorder %s33, 3
      %p62 = por %p60, %p61
      %p63 = scmp.ne.s32.totalorder %s55, %s58
      %p64 = scmp.eq.s32.totalorder %s33, 0
      %p65 = por %p63, %p64
      %p66 = scmp.ne.s32.totalorder %s55, %s58
      %p67 = scmp.eq.s32.totalorder %s38, 3
      %p68 = por %p66, %p67
      %p69 = scmp.ne.s32.totalorder %s58, %s59
      %p70 = scmp.eq.s32.totalorder %s38, 0
      %p71 = por %p69, %p70
      %p72 = scmp.ne.s32.totalorder %s58, %s59
      %p73 = scmp.eq.s32.totalorder %s39, 3
      %p74 = por %p72, %p73
      %p76 = scmp.ne.s32.totalorder %s59, %s75
      %p77 = scmp.eq.s32.totalorder %s39, 0
      %p78 = por %p76, %p77
      %s80 = sadd.s32 %s79, 1
      %p83 = scmp.eq.s32.totalorder %s33, 3
      %p84 = scmp.ne.s32.totalorder %s79, %s81
      %p85 = scmp.eq.s32.totalorder %s33, 0
      %p86 = por %p84, %p85
      %p87 = scmp.ne.s32.totalorder %s79, %s81
      %p88 = scmp.eq.s32.totalorder %s38, 3
      %p89 = por %p87, %p88
      %p90 = scmp.ne.s32.totalorder %s81, %s82
      %p91 = scmp.eq.s32.totalorder %s38, 0
      %p92 = por %p90, %p91
      %p93 = scmp.ne.s32.totalorder %s81, %s82
      %p94 = scmp.eq.s32.totalorder %s39, 3
      %p95 = por %p93, %p94
      %p97 = scmp.ne.s32.totalorder %s82, %s96
      %p98 = scmp.eq.s32.totalorder %s39, 0
      %p99 = por %p97, %p98
      %s101 = sadd.s32 %s100, 1
      %p104 = scmp.eq.s32.totalorder %s33, 3
      %p105 = scmp.ne.s32.totalorder %s100, %s102
      %p106 = scmp.eq.s32.totalorder %s33, 0
      %p107 = por %p105, %p106
      %p108 = scmp.ne.s32.totalorder %s100, %s102
      %p109 = scmp.eq.s32.totalorder %s38, 3
      %p110 = por %p108, %p109
      %p111 = scmp.ne.s32.totalorder %s102, %s103
      %p112 = scmp.eq.s32.totalorder %s38, 0
      %p113 = por %p111, %p112
      %p114 = scmp.ne.s32.totalorder %s102, %s103
      %p115 = scmp.eq.s32.totalorder %s39, 3
      %p116 = por %p114, %p115
      %p118 = scmp.ne.s32.totalorder %s103, %s117
      %p119 = scmp.eq.s32.totalorder %s39, 0
      %p120 = por %p118, %p119
      %s122 = sadd.s32 %s121, 1
      %p125 = scmp.eq.s32.totalorder %s33, 3
      %p126 = scmp.ne.s32.totalorder %s121, %s123
      %p127 = scmp.eq.s32.totalorder %s33, 0
      %p128 = por %p126, %p127
      %p129 = scmp.ne.s32.totalorder %s121, %s123
      %p130 = scmp.eq.s32.totalorder %s38, 3
      %p131 = por %p129, %p130
      %p132 = scmp.ne.s32.totalorder %s123, %s124
      %p133 = scmp.eq.s32.totalorder %s38, 0
      %p134 = por %p132, %p133
      %p135 = scmp.ne.s32.totalorder %s123, %s124
      %p136 = scmp.eq.s32.totalorder %s39, 3
      %p137 = por %p135, %p136
      %p139 = scmp.ne.s32.totalorder %s124, %s138
      %p140 = scmp.eq.s32.totalorder %s39, 0
      %p141 = por %p139, %p140
      %s142 = smul.u32 %s40, 2
      %s143 = sadd.s32 %s142, %s41
      %s144 = smul.u32 %s52, 2
      %s145 = sadd.s32 %s144, %s48
      %s146 = ssub.s32 %s143, %s145
      %p147 = scmp.eq.s32.totalorder %s146, 0
      %s149 = sadd.s32 %s148, 1
      %s150 = scalar_select %p147, %s148, %s149
      %p153 = pneg %p147
      %p154 = scmp.eq.s32.totalorder %s33, 3
      %p155 = por %p153, %p154
      %p156 = scmp.ne.s32.totalorder %s148, %s151
      %p157 = scmp.eq.s32.totalorder %s33, 0
      %p158 = por %p156, %p157
      %p159 = scmp.ne.s32.totalorder %s148, %s151
      %p160 = scmp.eq.s32.totalorder %s38, 3
      %p161 = por %p159, %p160
      %p162 = scmp.ne.s32.totalorder %s151, %s152
      %p163 = scmp.eq.s32.totalorder %s38, 0
      %p164 = por %p162, %p163
      %p165 = scmp.ne.s32.totalorder %s151, %s152
      %p166 = scmp.eq.s32.totalorder %s39, 3
      %p167 = por %p165, %p166
      %p169 = scmp.ne.s32.totalorder %s152, %s168
      %p170 = scmp.eq.s32.totalorder %s39, 0
      %p171 = por %p169, %p170
      %p172 = scmp.le.s32.totalorder 1, %s33
      %p173 = scmp.lt.s32.totalorder %s33, 5
      %p174 = pnand %p172, %p173
      %p175 = pneg %p174
      // Predicated region
      $region9: #{tpu_custom_call.1} parent=5 // pred_check
        _
      $region10: #{tpu_custom_call.1} parent=5 // pred_check_branch
        %177 = sbr.rel (%p174) target = $region12
      $region11: #{tpu_custom_call.1} parent=5 // pred_region
        %s178 = ssub.s32 %s33, 1
        // Predicated region
        $region13: #{tpu_custom_call.1} parent=11 // pred_check
          %p179 = pneg %p92
        $region14: #{tpu_custom_call.1} parent=11 // pred_check_branch
          %181 = sbr.rel (%p179) target = $region16
        $region15: #{tpu_custom_call.1} parent=11 // pred_region
          %183 = vsyncadd [#allocation12], 0
          %s184 = sshll.u32 %s4, 4
          %s185 = int_to_ptr.hbm [resolvable:$true] %s184
          %s186 = sshll.u32 [#allocation11], 4
          %s187 = int_to_ptr.vmem [resolvable:$true] %s186
          %192 = dma.hbm_to_vmem [thread:$0]  %s185, 256, %s187, [#allocation12], 128, 128, 8
        $region16: #{tpu_custom_call.1} parent=11 // pred_fallthru
          _
        // Predicated region
        $region17: #{tpu_custom_call.1} parent=11 // pred_check
          %p193 = pneg %p113
        $region18: #{tpu_custom_call.1} parent=11 // pred_check_branch
          %195 = sbr.rel (%p193) target = $region20
        $region19: #{tpu_custom_call.1} parent=11 // pred_region
          _
        $region20: #{tpu_custom_call.1} parent=11 // pred_fallthru
          _
        // Predicated region
        $region21: #{tpu_custom_call.1} parent=11 // pred_check
          %p196 = pneg %p134
        $region22: #{tpu_custom_call.1} parent=11 // pred_check_branch
          %198 = sbr.rel (%p196) target = $region24
        $region23: #{tpu_custom_call.1} parent=11 // pred_region
          _
        $region24: #{tpu_custom_call.1} parent=11 // pred_fallthru
          _
      $region12: #{tpu_custom_call.1} parent=5 // pred_fallthru
        _
      %p199 = scmp.lt.s32.totalorder %s33, 4
      // Predicated region
      $region25: #{tpu_custom_call.1} parent=5 // pred_check
        %p200 = pneg %p199
      $region26: #{tpu_custom_call.1} parent=5 // pred_check_branch
        %202 = sbr.rel (%p200) target = $region28
      $region27: #{tpu_custom_call.1} parent=5 // pred_region
        // Predicated region
        $region29: #{tpu_custom_call.1} parent=27 // pred_check
          %p203 = pneg %p65
        $region30: #{tpu_custom_call.1} parent=27 // pred_check_branch
          %205 = sbr.rel (%p203) target = $region32
        $region31: #{tpu_custom_call.1} parent=27 // pred_region
          %s206 = sand.u32 %s55, 1
          %s207 = scalar_lea.sflag [#allocation9], %s206
          %s208 = sand.u32 %s55, 1
          %s209 = smul.addr %s208, 8
          %s210 = scalar_lea.vmem [#allocation8], %s209
          %212 = vsyncadd %s207, 0
          %s213 = smul.addr %s41, 8
          %s214 = scalar_lea.hbm %s3, %s213
          %s216 = sshll.u32 %s214, 4
          %s217 = int_to_ptr.hbm [resolvable:$true] %s216
          %s218 = sshll.u32 %s210, 4
          %s219 = int_to_ptr.vmem [resolvable:$true] %s218
          %221 = dma.hbm_to_vmem [thread:$0]  %s217, 128, %s219, %s207
        $region32: #{tpu_custom_call.1} parent=27 // pred_fallthru
          _
      $region28: #{tpu_custom_call.1} parent=5 // pred_fallthru
        _
      %p222 = scmp.le.s32.totalorder 1, %s33
      %p223 = scmp.lt.s32.totalorder %s33, 5
      %p224 = pnand %p222, %p223
      %p225 = pneg %p224
      // Predicated region
      $region33: #{tpu_custom_call.1} parent=5 // pred_check
        _
      $region34: #{tpu_custom_call.1} parent=5 // pred_check_branch
        %227 = sbr.rel (%p224) target = $region36
      $region35: #{tpu_custom_call.1} parent=5 // pred_region
        %s228 = ssub.s32 %s33, 1
        %s229 = sand.u32 %s58, 1
        %s230 = scalar_lea.sflag [#allocation9], %s229
        %s231 = sand.u32 %s58, 1
        %s232 = smul.addr %s231, 8
        %s233 = scalar_lea.vmem [#allocation8], %s232
        // Predicated region
        $region37: #{tpu_custom_call.1} parent=35 // pred_check
          %p234 = pneg %p71
        $region38: #{tpu_custom_call.1} parent=35 // pred_check_branch
          %236 = sbr.rel (%p234) target = $region40
        $region39: #{tpu_custom_call.1} parent=35 // pred_region
          %238 = dma.done %s230, 128
        $region40: #{tpu_custom_call.1} parent=35 // pred_fallthru
          _
        // Predicated region
        $region41: #{tpu_custom_call.1} parent=35 // pred_check
          %p239 = pneg %p92
        $region42: #{tpu_custom_call.1} parent=35 // pred_check_branch
          %241 = sbr.rel (%p239) target = $region44
        $region43: #{tpu_custom_call.1} parent=35 // pred_region
          %243 = dma.done [#allocation12], 256
        $region44: #{tpu_custom_call.1} parent=35 // pred_fallthru
          _
        %s244 = sand.u32 %s58, 1
        %s245 = scalar_lea.sflag [#allocation9], %s244
        %s246 = sand.u32 %s58, 1
        %s247 = smul.addr %s246, 8
        %s248 = scalar_lea.vmem [#allocation8], %s247
        %p249 = pneg %p71
        %p250 = pneg %p68
        %p251 = pneg %p92
        %p252 = pneg %p89
        %p253 = pneg %p113
        %p254 = pneg %p110
        %p255 = pneg %p134
        %p256 = pneg %p131
        %p257 = pneg %p164
        %p258 = pneg %p161
        %s259 = sand.u32 %s151, 1
        %s260 = scalar_lea.sflag [#allocation10], %s259
        %s261 = sand.u32 %s151, 1
        %s262 = smul.addr %s261, 8
        %s263 = scalar_lea.vmem [#allocation13], %s262
        %s264 = smul.u32 %s42, 2
        %s265 = sadd.s32 %s264, %s43
        %p266 = scmp.lt.s32.totalorder %s43, 0
        %s267 = ssub.s32 0, %s43
        %s268 = scalar_select %p266, %s267, %s43
        %s269 = sand.u32 %s268, 1
        %s270 = ssub.s32 0, %s269
        %s271 = scalar_select %p266, %s270, %s269
        %p272 = scmp.ne.s32.totalorder %s271, 0
        %p273 = scmp.lt.s32.totalorder %s271, 0
        %p274 = pnand %p273, %p272
        %p275 = pneg %p274
        %s276 = sadd.s32 %s271, 2
        %s277 = scalar_select %p275, %s276, %s271
        %p278 = scmp.eq.s32.totalorder %s43, 0
        // Predicated region
        $region45: #{tpu_custom_call.1} parent=35 // pred_check
          %p279 = pneg %p278
        $region46: #{tpu_custom_call.1} parent=35 // pred_check_branch
          %281 = sbr.rel (%p279) target = $region48
        $region47: #{tpu_custom_call.1} parent=35 // pred_region
          %s282 = smul.u32 %s43, 8
          %s283 = sshra.s32 %s282, 7
          %s284 = sand.u32 %s282, 127
          %s285 = sadd.s32 %s283, %s42
          %s286 = smul.u32 %s285, 128
          %s287 = sshra.s32 %s282, 7
          %s288 = sand.u32 %s282, 127
          %s289 = sadd.s32 %s286, %s288
          %s290 = sld [smem:[#allocation6 + %s289]]
          %s291 = scalar_lea.hbm %s2, %s290
          %s292 = smul.u32 %s277, 8
          %s293 = scalar_lea.vmem [#allocation2], %s292
          %s294 = scalar_lea.sflag [#allocation4], %s277
          // Predicated region
          $region49: #{tpu_custom_call.1} parent=47 // pred_check
            _
          $region50: #{tpu_custom_call.1} parent=47 // pred_check_branch
            %296 = sbr.rel target = $region52
          $region51: #{tpu_custom_call.1} parent=47 // pred_region
            %297 = sst [smem:[#allocation16]] [#allocation15]
            %298 = sst [smem:[#allocation17]] [#allocation14]
          $region52: #{tpu_custom_call.1} parent=47 // pred_fallthru
            _
          %300 = shalt.err (0)
          %s302 = sshll.u32 %s291, 4
          %s303 = int_to_ptr.hbm [resolvable:$true] %s302
          %s304 = sshll.u32 %s293, 4
          %s305 = int_to_ptr.vmem [resolvable:$true] %s304
          %307 = dma.hbm_to_vmem [thread:$0]  %s303, 16, %s305, %s294
          %s308 = sadd.s32 %s282, 1
          %s309 = sshra.s32 %s308, 7
          %s310 = sand.u32 %s308, 127
          %s311 = sadd.s32 %s309, %s42
          %s312 = smul.u32 %s311, 128
          %s313 = sshra.s32 %s308, 7
          %s314 = sand.u32 %s308, 127
          %s315 = sadd.s32 %s312, %s314
          %s316 = sld [smem:[#allocation6 + %s315]]
          %s317 = scalar_lea.hbm %s2, %s316
          %s318 = sadd.s32 1, %s292
          %s319 = scalar_lea.vmem [#allocation2], %s318
          // Predicated region
          $region53: #{tpu_custom_call.1} parent=47 // pred_check
            _
          $region54: #{tpu_custom_call.1} parent=47 // pred_check_branch
            %321 = sbr.rel target = $region56
          $region55: #{tpu_custom_call.1} parent=47 // pred_region
            %322 = sst [smem:[#allocation16]] [#allocation19]
            %323 = sst [smem:[#allocation17]] [#allocation18]
          $region56: #{tpu_custom_call.1} parent=47 // pred_fallthru
            _
          %325 = shalt.err (0)
          %s327 = sshll.u32 %s317, 4
          %s328 = int_to_ptr.hbm [resolvable:$true] %s327
          %s329 = sshll.u32 %s319, 4
          %s330 = int_to_ptr.vmem [resolvable:$true] %s329
          %332 = dma.hbm_to_vmem [thread:$0]  %s328, 16, %s330, %s294
          %s333 = sadd.s32 %s282, 2
          %s334 = sshra.s32 %s333, 7
          %s335 = sand.u32 %s333, 127
          %s336 = sadd.s32 %s334, %s42
          %s337 = smul.u32 %s336, 128
          %s338 = sshra.s32 %s333, 7
          %s339 = sand.u32 %s333, 127
          %s340 = sadd.s32 %s337, %s339
          %s341 = sld [smem:[#allocation6 + %s340]]
          %s342 = scalar_lea.hbm %s2, %s341
          %s343 = sadd.s32 2, %s292
          %s344 = scalar_lea.vmem [#allocation2], %s343
          // Predicated region
          $region57: #{tpu_custom_call.1} parent=47 // pred_check
            _
          $region58: #{tpu_custom_call.1} parent=47 // pred_check_branch
            %346 = sbr.rel target = $region60
          $region59: #{tpu_custom_call.1} parent=47 // pred_region
            %347 = sst [smem:[#allocation16]] [#allocation21]
            %348 = sst [smem:[#allocation17]] [#allocation20]
          $region60: #{tpu_custom_call.1} parent=47 // pred_fallthru
            _
          %350 = shalt.err (0)
          %s352 = sshll.u32 %s342, 4
          %s353 = int_to_ptr.hbm [resolvable:$true] %s352
          %s354 = sshll.u32 %s344, 4
          %s355 = int_to_ptr.vmem [resolvable:$true] %s354
          %357 = dma.hbm_to_vmem [thread:$0]  %s353, 16, %s355, %s294
          %s358 = sadd.s32 %s282, 3
          %s359 = sshra.s32 %s358, 7
          %s360 = sand.u32 %s358, 127
          %s361 = sadd.s32 %s359, %s42
          %s362 = smul.u32 %s361, 128
          %s363 = sshra.s32 %s358, 7
          %s364 = sand.u32 %s358, 127
          %s365 = sadd.s32 %s362, %s364
          %s366 = sld [smem:[#allocation6 + %s365]]
          %s367 = scalar_lea.hbm %s2, %s366
          %s368 = sadd.s32 3, %s292
          %s369 = scalar_lea.vmem [#allocation2], %s368
          // Predicated region
          $region61: #{tpu_custom_call.1} parent=47 // pred_check
            _
          $region62: #{tpu_custom_call.1} parent=47 // pred_check_branch
            %371 = sbr.rel target = $region64
          $region63: #{tpu_custom_call.1} parent=47 // pred_region
            %372 = sst [smem:[#allocation16]] [#allocation23]
            %373 = sst [smem:[#allocation17]] [#allocation22]
          $region64: #{tpu_custom_call.1} parent=47 // pred_fallthru
            _
          %375 = shalt.err (0)
          %s377 = sshll.u32 %s367, 4
          %s378 = int_to_ptr.hbm [resolvable:$true] %s377
          %s379 = sshll.u32 %s369, 4
          %s380 = int_to_ptr.vmem [resolvable:$true] %s379
          %382 = dma.hbm_to_vmem [thread:$0]  %s378, 16, %s380, %s294
          %s383 = sadd.s32 %s282, 4
          %s384 = sshra.s32 %s383, 7
          %s385 = sand.u32 %s383, 127
          %s386 = sadd.s32 %s384, %s42
          %s387 = smul.u32 %s386, 128
          %s388 = sshra.s32 %s383, 7
          %s389 = sand.u32 %s383, 127
          %s390 = sadd.s32 %s387, %s389
          %s391 = sld [smem:[#allocation6 + %s390]]
          %s392 = scalar_lea.hbm %s2, %s391
          %s393 = sadd.s32 4, %s292
          %s394 = scalar_lea.vmem [#allocation2], %s393
          // Predicated region
          $region65: #{tpu_custom_call.1} parent=47 // pred_check
            _
          $region66: #{tpu_custom_call.1} parent=47 // pred_check_branch
            %396 = sbr.rel target = $region68
          $region67: #{tpu_custom_call.1} parent=47 // pred_region
            %397 = sst [smem:[#allocation16]] [#allocation25]
            %398 = sst [smem:[#allocation17]] [#allocation24]
          $region68: #{tpu_custom_call.1} parent=47 // pred_fallthru
            _
          %400 = shalt.err (0)
          %s402 = sshll.u32 %s392, 4
          %s403 = int_to_ptr.hbm [resolvable:$true] %s402
          %s404 = sshll.u32 %s394, 4
          %s405 = int_to_ptr.vmem [resolvable:$true] %s404
          %407 = dma.hbm_to_vmem [thread:$0]  %s403, 16, %s405, %s294
          %s408 = sadd.s32 %s282, 5
          %s409 = sshra.s32 %s408, 7
          %s410 = sand.u32 %s408, 127
          %s411 = sadd.s32 %s409, %s42
          %s412 = smul.u32 %s411, 128
          %s413 = sshra.s32 %s408, 7
          %s414 = sand.u32 %s408, 127
          %s415 = sadd.s32 %s412, %s414
          %s416 = sld [smem:[#allocation6 + %s415]]
          %s417 = scalar_lea.hbm %s2, %s416
          %s418 = sadd.s32 5, %s292
          %s419 = scalar_lea.vmem [#allocation2], %s418
          // Predicated region
          $region69: #{tpu_custom_call.1} parent=47 // pred_check
            _
          $region70: #{tpu_custom_call.1} parent=47 // pred_check_branch
            %421 = sbr.rel target = $region72
          $region71: #{tpu_custom_call.1} parent=47 // pred_region
            %422 = sst [smem:[#allocation16]] [#allocation27]
            %423 = sst [smem:[#allocation17]] [#allocation26]
          $region72: #{tpu_custom_call.1} parent=47 // pred_fallthru
            _
          %425 = shalt.err (0)
          %s427 = sshll.u32 %s417, 4
          %s428 = int_to_ptr.hbm [resolvable:$true] %s427
          %s429 = sshll.u32 %s419, 4
          %s430 = int_to_ptr.vmem [resolvable:$true] %s429
          %432 = dma.hbm_to_vmem [thread:$0]  %s428, 16, %s430, %s294
          %s433 = sadd.s32 %s282, 6
          %s434 = sshra.s32 %s433, 7
          %s435 = sand.u32 %s433, 127
          %s436 = sadd.s32 %s434, %s42
          %s437 = smul.u32 %s436, 128
          %s438 = sshra.s32 %s433, 7
          %s439 = sand.u32 %s433, 127
          %s440 = sadd.s32 %s437, %s439
          %s441 = sld [smem:[#allocation6 + %s440]]
          %s442 = scalar_lea.hbm %s2, %s441
          %s443 = sadd.s32 6, %s292
          %s444 = scalar_lea.vmem [#allocation2], %s443
          // Predicated region
          $region73: #{tpu_custom_call.1} parent=47 // pred_check
            _
          $region74: #{tpu_custom_call.1} parent=47 // pred_check_branch
            %446 = sbr.rel target = $region76
          $region75: #{tpu_custom_call.1} parent=47 // pred_region
            %447 = sst [smem:[#allocation16]] [#allocation29]
            %448 = sst [smem:[#allocation17]] [#allocation28]
          $region76: #{tpu_custom_call.1} parent=47 // pred_fallthru
            _
          %450 = shalt.err (0)
          %s452 = sshll.u32 %s442, 4
          %s453 = int_to_ptr.hbm [resolvable:$true] %s452
          %s454 = sshll.u32 %s444, 4
          %s455 = int_to_ptr.vmem [resolvable:$true] %s454
          %457 = dma.hbm_to_vmem [thread:$0]  %s453, 16, %s455, %s294
          %s458 = sadd.s32 %s282, 7
          %s459 = sshra.s32 %s458, 7
          %s460 = sand.u32 %s458, 127
          %s461 = sadd.s32 %s459, %s42
          %s462 = smul.u32 %s461, 128
          %s463 = sshra.s32 %s458, 7
          %s464 = sand.u32 %s458, 127
          %s465 = sadd.s32 %s462, %s464
          %s466 = sld [smem:[#allocation6 + %s465]]
          %s467 = scalar_lea.hbm %s2, %s466
          %s468 = sadd.s32 7, %s292
          %s469 = scalar_lea.vmem [#allocation2], %s468
          // Predicated region
          $region77: #{tpu_custom_call.1} parent=47 // pred_check
            _
          $region78: #{tpu_custom_call.1} parent=47 // pred_check_branch
            %471 = sbr.rel target = $region80
          $region79: #{tpu_custom_call.1} parent=47 // pred_region
            %472 = sst [smem:[#allocation16]] [#allocation31]
            %473 = sst [smem:[#allocation17]] [#allocation30]
          $region80: #{tpu_custom_call.1} parent=47 // pred_fallthru
            _
          %475 = shalt.err (0)
          %s477 = sshll.u32 %s467, 4
          %s478 = int_to_ptr.hbm [resolvable:$true] %s477
          %s479 = sshll.u32 %s469, 4
          %s480 = int_to_ptr.vmem [resolvable:$true] %s479
          %482 = dma.hbm_to_vmem [thread:$0]  %s478, 16, %s480, %s294
        $region48: #{tpu_custom_call.1} parent=35 // pred_fallthru
          _
        %s483 = sadd.s32 %s43, 1
        %p484 = scmp.lt.s32.totalorder %s483, 2
        // Predicated region
        $region81: #{tpu_custom_call.1} parent=35 // pred_check
          %p485 = pneg %p484
        $region82: #{tpu_custom_call.1} parent=35 // pred_check_branch
          %487 = sbr.rel (%p485) target = $region84
        $region83: #{tpu_custom_call.1} parent=35 // pred_region
          %s488 = ssub.s32 1, %s277
          %s489 = smul.u32 %s483, 8
          %s490 = sshra.s32 %s489, 7
          %s491 = sand.u32 %s489, 127
          %s492 = sadd.s32 %s490, %s42
          %s493 = smul.u32 %s492, 128
          %s494 = sshra.s32 %s489, 7
          %s495 = sand.u32 %s489, 127
          %s496 = sadd.s32 %s493, %s495
          %s497 = sld [smem:[#allocation6 + %s496]]
          %s498 = scalar_lea.hbm %s2, %s497
          %s499 = smul.u32 %s488, 8
          %s500 = scalar_lea.vmem [#allocation2], %s499
          %s501 = scalar_lea.sflag [#allocation4], %s488
          // Predicated region
          $region85: #{tpu_custom_call.1} parent=83 // pred_check
            _
          $region86: #{tpu_custom_call.1} parent=83 // pred_check_branch
            %503 = sbr.rel target = $region88
          $region87: #{tpu_custom_call.1} parent=83 // pred_region
            %504 = sst [smem:[#allocation16]] [#allocation33]
            %505 = sst [smem:[#allocation17]] [#allocation32]
          $region88: #{tpu_custom_call.1} parent=83 // pred_fallthru
            _
          %507 = shalt.err (0)
          %s509 = sshll.u32 %s498, 4
          %s510 = int_to_ptr.hbm [resolvable:$true] %s509
          %s511 = sshll.u32 %s500, 4
          %s512 = int_to_ptr.vmem [resolvable:$true] %s511
          %514 = dma.hbm_to_vmem [thread:$0]  %s510, 16, %s512, %s501
          %s515 = sadd.s32 %s489, 1
          %s516 = sshra.s32 %s515, 7
          %s517 = sand.u32 %s515, 127
          %s518 = sadd.s32 %s516, %s42
          %s519 = smul.u32 %s518, 128
          %s520 = sshra.s32 %s515, 7
          %s521 = sand.u32 %s515, 127
          %s522 = sadd.s32 %s519, %s521
          %s523 = sld [smem:[#allocation6 + %s522]]
          %s524 = scalar_lea.hbm %s2, %s523
          %s525 = sadd.s32 1, %s499
          %s526 = scalar_lea.vmem [#allocation2], %s525
          // Predicated region
          $region89: #{tpu_custom_call.1} parent=83 // pred_check
            _
          $region90: #{tpu_custom_call.1} parent=83 // pred_check_branch
            %528 = sbr.rel target = $region92
          $region91: #{tpu_custom_call.1} parent=83 // pred_region
            %529 = sst [smem:[#allocation16]] [#allocation35]
            %530 = sst [smem:[#allocation17]] [#allocation34]
          $region92: #{tpu_custom_call.1} parent=83 // pred_fallthru
            _
          %532 = shalt.err (0)
          %s534 = sshll.u32 %s524, 4
          %s535 = int_to_ptr.hbm [resolvable:$true] %s534
          %s536 = sshll.u32 %s526, 4
          %s537 = int_to_ptr.vmem [resolvable:$true] %s536
          %539 = dma.hbm_to_vmem [thread:$0]  %s535, 16, %s537, %s501
          %s540 = sadd.s32 %s489, 2
          %s541 = sshra.s32 %s540, 7
          %s542 = sand.u32 %s540, 127
          %s543 = sadd.s32 %s541, %s42
          %s544 = smul.u32 %s543, 128
          %s545 = sshra.s32 %s540, 7
          %s546 = sand.u32 %s540, 127
          %s547 = sadd.s32 %s544, %s546
          %s548 = sld [smem:[#allocation6 + %s547]]
          %s549 = scalar_lea.hbm %s2, %s548
          %s550 = sadd.s32 2, %s499
          %s551 = scalar_lea.vmem [#allocation2], %s550
          // Predicated region
          $region93: #{tpu_custom_call.1} parent=83 // pred_check
            _
          $region94: #{tpu_custom_call.1} parent=83 // pred_check_branch
            %553 = sbr.rel target = $region96
          $region95: #{tpu_custom_call.1} parent=83 // pred_region
            %554 = sst [smem:[#allocation16]] [#allocation37]
            %555 = sst [smem:[#allocation17]] [#allocation36]
          $region96: #{tpu_custom_call.1} parent=83 // pred_fallthru
            _
          %557 = shalt.err (0)
          %s559 = sshll.u32 %s549, 4
          %s560 = int_to_ptr.hbm [resolvable:$true] %s559
          %s561 = sshll.u32 %s551, 4
          %s562 = int_to_ptr.vmem [resolvable:$true] %s561
          %564 = dma.hbm_to_vmem [thread:$0]  %s560, 16, %s562, %s501
          %s565 = sadd.s32 %s489, 3
          %s566 = sshra.s32 %s565, 7
          %s567 = sand.u32 %s565, 127
          %s568 = sadd.s32 %s566, %s42
          %s569 = smul.u32 %s568, 128
          %s570 = sshra.s32 %s565, 7
          %s571 = sand.u32 %s565, 127
          %s572 = sadd.s32 %s569, %s571
          %s573 = sld [smem:[#allocation6 + %s572]]
          %s574 = scalar_lea.hbm %s2, %s573
          %s575 = sadd.s32 3, %s499
          %s576 = scalar_lea.vmem [#allocation2], %s575
          // Predicated region
          $region97: #{tpu_custom_call.1} parent=83 // pred_check
            _
          $region98: #{tpu_custom_call.1} parent=83 // pred_check_branch
            %578 = sbr.rel target = $region100
          $region99: #{tpu_custom_call.1} parent=83 // pred_region
            %579 = sst [smem:[#allocation16]] [#allocation39]
            %580 = sst [smem:[#allocation17]] [#allocation38]
          $region100: #{tpu_custom_call.1} parent=83 // pred_fallthru
            _
          %582 = shalt.err (0)
          %s584 = sshll.u32 %s574, 4
          %s585 = int_to_ptr.hbm [resolvable:$true] %s584
          %s586 = sshll.u32 %s576, 4
          %s587 = int_to_ptr.vmem [resolvable:$true] %s586
          %589 = dma.hbm_to_vmem [thread:$0]  %s585, 16, %s587, %s501
          %s590 = sadd.s32 %s489, 4
          %s591 = sshra.s32 %s590, 7
          %s592 = sand.u32 %s590, 127
          %s593 = sadd.s32 %s591, %s42
          %s594 = smul.u32 %s593, 128
          %s595 = sshra.s32 %s590, 7
          %s596 = sand.u32 %s590, 127
          %s597 = sadd.s32 %s594, %s596
          %s598 = sld [smem:[#allocation6 + %s597]]
          %s599 = scalar_lea.hbm %s2, %s598
          %s600 = sadd.s32 4, %s499
          %s601 = scalar_lea.vmem [#allocation2], %s600
          // Predicated region
          $region101: #{tpu_custom_call.1} parent=83 // pred_check
            _
          $region102: #{tpu_custom_call.1} parent=83 // pred_check_branch
            %603 = sbr.rel target = $region104
          $region103: #{tpu_custom_call.1} parent=83 // pred_region
            %604 = sst [smem:[#allocation16]] [#allocation41]
            %605 = sst [smem:[#allocation17]] [#allocation40]
          $region104: #{tpu_custom_call.1} parent=83 // pred_fallthru
            _
          %607 = shalt.err (0)
          %s609 = sshll.u32 %s599, 4
          %s610 = int_to_ptr.hbm [resolvable:$true] %s609
          %s611 = sshll.u32 %s601, 4
          %s612 = int_to_ptr.vmem [resolvable:$true] %s611
          %614 = dma.hbm_to_vmem [thread:$0]  %s610, 16, %s612, %s501
          %s615 = sadd.s32 %s489, 5
          %s616 = sshra.s32 %s615, 7
          %s617 = sand.u32 %s615, 127
          %s618 = sadd.s32 %s616, %s42
          %s619 = smul.u32 %s618, 128
          %s620 = sshra.s32 %s615, 7
          %s621 = sand.u32 %s615, 127
          %s622 = sadd.s32 %s619, %s621
          %s623 = sld [smem:[#allocation6 + %s622]]
          %s624 = scalar_lea.hbm %s2, %s623
          %s625 = sadd.s32 5, %s499
          %s626 = scalar_lea.vmem [#allocation2], %s625
          // Predicated region
          $region105: #{tpu_custom_call.1} parent=83 // pred_check
            _
          $region106: #{tpu_custom_call.1} parent=83 // pred_check_branch
            %628 = sbr.rel target = $region108
          $region107: #{tpu_custom_call.1} parent=83 // pred_region
            %629 = sst [smem:[#allocation16]] [#allocation43]
            %630 = sst [smem:[#allocation17]] [#allocation42]
          $region108: #{tpu_custom_call.1} parent=83 // pred_fallthru
            _
          %632 = shalt.err (0)
          %s634 = sshll.u32 %s624, 4
          %s635 = int_to_ptr.hbm [resolvable:$true] %s634
          %s636 = sshll.u32 %s626, 4
          %s637 = int_to_ptr.vmem [resolvable:$true] %s636
          %639 = dma.hbm_to_vmem [thread:$0]  %s635, 16, %s637, %s501
          %s640 = sadd.s32 %s489, 6
          %s641 = sshra.s32 %s640, 7
          %s642 = sand.u32 %s640, 127
          %s643 = sadd.s32 %s641, %s42
          %s644 = smul.u32 %s643, 128
          %s645 = sshra.s32 %s640, 7
          %s646 = sand.u32 %s640, 127
          %s647 = sadd.s32 %s644, %s646
          %s648 = sld [smem:[#allocation6 + %s647]]
          %s649 = scalar_lea.hbm %s2, %s648
          %s650 = sadd.s32 6, %s499
          %s651 = scalar_lea.vmem [#allocation2], %s650
          // Predicated region
          $region109: #{tpu_custom_call.1} parent=83 // pred_check
            _
          $region110: #{tpu_custom_call.1} parent=83 // pred_check_branch
            %653 = sbr.rel target = $region112
          $region111: #{tpu_custom_call.1} parent=83 // pred_region
            %654 = sst [smem:[#allocation16]] [#allocation45]
            %655 = sst [smem:[#allocation17]] [#allocation44]
          $region112: #{tpu_custom_call.1} parent=83 // pred_fallthru
            _
          %657 = shalt.err (0)
          %s659 = sshll.u32 %s649, 4
          %s660 = int_to_ptr.hbm [resolvable:$true] %s659
          %s661 = sshll.u32 %s651, 4
          %s662 = int_to_ptr.vmem [resolvable:$true] %s661
          %664 = dma.hbm_to_vmem [thread:$0]  %s660, 16, %s662, %s501
          %s665 = sadd.s32 %s489, 7
          %s666 = sshra.s32 %s665, 7
          %s667 = sand.u32 %s665, 127
          %s668 = sadd.s32 %s666, %s42
          %s669 = smul.u32 %s668, 128
          %s670 = sshra.s32 %s665, 7
          %s671 = sand.u32 %s665, 127
          %s672 = sadd.s32 %s669, %s671
          %s673 = sld [smem:[#allocation6 + %s672]]
          %s674 = scalar_lea.hbm %s2, %s673
          %s675 = sadd.s32 7, %s499
          %s676 = scalar_lea.vmem [#allocation2], %s675
          // Predicated region
          $region113: #{tpu_custom_call.1} parent=83 // pred_check
            _
          $region114: #{tpu_custom_call.1} parent=83 // pred_check_branch
            %678 = sbr.rel target = $region116
          $region115: #{tpu_custom_call.1} parent=83 // pred_region
            %679 = sst [smem:[#allocation16]] [#allocation47]
            %680 = sst [smem:[#allocation17]] [#allocation46]
          $region116: #{tpu_custom_call.1} parent=83 // pred_fallthru
            _
          %682 = shalt.err (0)
          %s684 = sshll.u32 %s674, 4
          %s685 = int_to_ptr.hbm [resolvable:$true] %s684
          %s686 = sshll.u32 %s676, 4
          %s687 = int_to_ptr.vmem [resolvable:$true] %s686
          %689 = dma.hbm_to_vmem [thread:$0]  %s685, 16, %s687, %s501
        $region84: #{tpu_custom_call.1} parent=35 // pred_fallthru
          _
        %s690 = scalar_lea.sflag [#allocation4], %s277
        %692 = dma.done %s690, 16
        %694 = dma.done %s690, 16
        %696 = dma.done %s690, 16
        %698 = dma.done %s690, 16
        %700 = dma.done %s690, 16
        %702 = dma.done %s690, 16
        %704 = dma.done %s690, 16
        %706 = dma.done %s690, 16
        %s707 = smul.u32 %s43, 8
        %s708 = sshra.s32 %s707, 7
        %s709 = sand.u32 %s707, 127
        %s710 = sadd.s32 %s708, %s42
        %s711 = smul.u32 %s710, 128
        %s712 = sshra.s32 %s707, 7
        %s713 = sand.u32 %s707, 127
        %s714 = sadd.s32 %s711, %s713
        %s715 = sld [smem:[#allocation7 + %s714]]
        %s716 = scalar_lea.vmem [#allocation11], %s715
        %v717 = vld [vmem:[%s716] sm:$0x1]
        %718 = vst [vmem:[#allocation3] sm:$0x1] %v717
        %s719 = sadd.s32 %s707, 1
        %s720 = sshra.s32 %s719, 7
        %s721 = sand.u32 %s719, 127
        %s722 = sadd.s32 %s720, %s42
        %s723 = smul.u32 %s722, 128
        %s724 = sshra.s32 %s719, 7
        %s725 = sand.u32 %s719, 127
        %s726 = sadd.s32 %s723, %s725
        %s727 = sld [smem:[#allocation7 + %s726]]
        %s728 = scalar_lea.vmem [#allocation11], %s727
        %v729 = vld [vmem:[%s728] sm:$0x1]
        %730 = vst [vmem:[#allocation3 + $0x1] sm:$0x1] %v729
        %s731 = sadd.s32 %s707, 2
        %s732 = sshra.s32 %s731, 7
        %s733 = sand.u32 %s731, 127
        %s734 = sadd.s32 %s732, %s42
        %s735 = smul.u32 %s734, 128
        %s736 = sshra.s32 %s731, 7
        %s737 = sand.u32 %s731, 127
        %s738 = sadd.s32 %s735, %s737
        %s739 = sld [smem:[#allocation7 + %s738]]
        %s740 = scalar_lea.vmem [#allocation11], %s739
        %v741 = vld [vmem:[%s740] sm:$0x1]
        %742 = vst [vmem:[#allocation3 + $0x2] sm:$0x1] %v741
        %s743 = sadd.s32 %s707, 3
        %s744 = sshra.s32 %s743, 7
        %s745 = sand.u32 %s743, 127
        %s746 = sadd.s32 %s744, %s42
        %s747 = smul.u32 %s746, 128
        %s748 = sshra.s32 %s743, 7
        %s749 = sand.u32 %s743, 127
        %s750 = sadd.s32 %s747, %s749
        %s751 = sld [smem:[#allocation7 + %s750]]
        %s752 = scalar_lea.vmem [#allocation11], %s751
        %v753 = vld [vmem:[%s752] sm:$0x1]
        %754 = vst [vmem:[#allocation3 + $0x3] sm:$0x1] %v753
        %s755 = sadd.s32 %s707, 4
        %s756 = sshra.s32 %s755, 7
        %s757 = sand.u32 %s755, 127
        %s758 = sadd.s32 %s756, %s42
        %s759 = smul.u32 %s758, 128
        %s760 = sshra.s32 %s755, 7
        %s761 = sand.u32 %s755, 127
        %s762 = sadd.s32 %s759, %s761
        %s763 = sld [smem:[#allocation7 + %s762]]
        %s764 = scalar_lea.vmem [#allocation11], %s763
        %v765 = vld [vmem:[%s764] sm:$0x1]
        %766 = vst [vmem:[#allocation3 + $0x4] sm:$0x1] %v765
        %s767 = sadd.s32 %s707, 5
        %s768 = sshra.s32 %s767, 7
        %s769 = sand.u32 %s767, 127
        %s770 = sadd.s32 %s768, %s42
        %s771 = smul.u32 %s770, 128
        %s772 = sshra.s32 %s767, 7
        %s773 = sand.u32 %s767, 127
        %s774 = sadd.s32 %s771, %s773
        %s775 = sld [smem:[#allocation7 + %s774]]
        %s776 = scalar_lea.vmem [#allocation11], %s775
        %v777 = vld [vmem:[%s776] sm:$0x1]
        %778 = vst [vmem:[#allocation3 + $0x5] sm:$0x1] %v777
        %s779 = sadd.s32 %s707, 6
        %s780 = sshra.s32 %s779, 7
        %s781 = sand.u32 %s779, 127
        %s782 = sadd.s32 %s780, %s42
        %s783 = smul.u32 %s782, 128
        %s784 = sshra.s32 %s779, 7
        %s785 = sand.u32 %s779, 127
        %s786 = sadd.s32 %s783, %s785
        %s787 = sld [smem:[#allocation7 + %s786]]
        %s788 = scalar_lea.vmem [#allocation11], %s787
        %v789 = vld [vmem:[%s788] sm:$0x1]
        %790 = vst [vmem:[#allocation3 + $0x6] sm:$0x1] %v789
        %s791 = sadd.s32 %s707, 7
        %s792 = sshra.s32 %s791, 7
        %s793 = sand.u32 %s791, 127
        %s794 = sadd.s32 %s792, %s42
        %s795 = smul.u32 %s794, 128
        %s796 = sshra.s32 %s791, 7
        %s797 = sand.u32 %s791, 127
        %s798 = sadd.s32 %s795, %s797
        %s799 = sld [smem:[#allocation7 + %s798]]
        %s800 = scalar_lea.vmem [#allocation11], %s799
        %v801 = vld [vmem:[%s800] sm:$0x1]
        %802 = vst [vmem:[#allocation3 + $0x7] sm:$0x1] %v801
        %s803 = smul.u32 %s277, 8
        %s804 = scalar_lea.vmem [#allocation2], %s803
        %v805 = vld [vmem:[%s804] sm:$0xff]
        %v806 = vld [vmem:[%s233] sm:$0xff]
        %v807 = vadd.f32 %v805, %v806
        %v808 = vld [vmem:[#allocation3] sm:$0xff]
        %v809 = vadd.f32 %v807, %v808
        %810 = vadd.xlane.f32.xlu0 %v809
        %v811 = vpop.xlane.xlu0 %810
        %v812 = vrcp.pop 128.0
        %v813 = vmul.f32 128.0, %v812
        %v814 = vsub.f32 1.0, %v813
        %v815 = vmul.f32 %v812, %v814
        %v816 = vadd.f32 %v812, %v815
        %vm817 = vweird.f32 %v812
        %v818 = vsel %vm817, %v812, %v816
        %v819 = vmul.f32 %v811, %v818
        %v820 = vsub.f32 %v809, %v819
        %v821 = vmul.f32 %v820, %v820
        %822 = vadd.xlane.f32.xlu0 %v821
        %v823 = vpop.xlane.xlu0 %822
        %v824 = vmul.f32 %v823, %v818
        %v825 = vadd.f32 %v824, 1e-05
        %v826 = vrsqrt.pop %v825
        %v827 = vmul.f32 %v826, %v825
        %v828 = vmul.f32 %v827, %v826
        %v829 = vmul.f32 0.5, %v828
        %v830 = vsub.f32 1.5, %v829
        %v831 = vmul.f32 %v826, %v830
        %vm832 = vweird.f32 %v825
        %vm833 = vweird.f32 %v826
        %vm834 = vmor %vm832, %vm833
        %v835 = vsel %vm834, %v826, %v831
        %v836 = vmul.f32 %v820, %v835
        %v837 = vld [vmem:[%s5] sm:$0x1]
        %v839 = vperm.slane %v837, 0
        %v841 = vmul.f32 %v836, %v839
        %v842 = vld [vmem:[%s6] sm:$0x1]
        %v844 = vperm.slane %v842, 0
        %v846 = vadd.f32 %v841, %v844
        %847 = vst [vmem:[%s263] sm:$0xff] %v846
        %s848 = sand.u32 %s151, 1
        %s849 = scalar_lea.sflag [#allocation10], %s848
        %s850 = sand.u32 %s151, 1
        %s851 = smul.addr %s850, 8
        %s852 = scalar_lea.vmem [#allocation13], %s851
        // Predicated region
        $region117: #{tpu_custom_call.1} parent=35 // pred_check
          %p853 = pneg %p161
        $region118: #{tpu_custom_call.1} parent=35 // pred_check_branch
          %855 = sbr.rel (%p853) target = $region120
        $region119: #{tpu_custom_call.1} parent=35 // pred_region
          %s856 = smul.u32 %s42, 2
          %s857 = sadd.s32 %s856, %s43
          %859 = vsyncadd %s849, 0
          %s860 = smul.addr %s857, 8
          %s861 = scalar_lea.hbm %s7, %s860
          %s863 = sshll.u32 %s852, 4
          %s864 = int_to_ptr.vmem [resolvable:$true] %s863
          %s865 = sshll.u32 %s861, 4
          %s866 = int_to_ptr.hbm [resolvable:$true] %s865
          %868 = dma.vmem_to_hbm [thread:$0]  %s864, 128, %s866, %s849
        $region120: #{tpu_custom_call.1} parent=35 // pred_fallthru
          _
      $region36: #{tpu_custom_call.1} parent=5 // pred_fallthru
        _
      %p869 = scmp.le.s32.totalorder 2, %s33
      // Predicated region
      $region121: #{tpu_custom_call.1} parent=5 // pred_check
        %p870 = pneg %p869
      $region122: #{tpu_custom_call.1} parent=5 // pred_check_branch
        %872 = sbr.rel (%p870) target = $region124
      $region123: #{tpu_custom_call.1} parent=5 // pred_region
        %s873 = ssub.s32 %s33, 2
        // Predicated region
        $region125: #{tpu_custom_call.1} parent=123 // pred_check
          %p874 = pneg %p167
        $region126: #{tpu_custom_call.1} parent=123 // pred_check_branch
          %876 = sbr.rel (%p874) target = $region128
        $region127: #{tpu_custom_call.1} parent=123 // pred_region
          %s877 = sand.u32 %s152, 1
          %s878 = scalar_lea.sflag [#allocation10], %s877
          %s879 = sand.u32 %s152, 1
          %s880 = smul.addr %s879, 8
          %s881 = scalar_lea.vmem [#allocation13], %s880
          %883 = dma.done %s878, 128
        $region128: #{tpu_custom_call.1} parent=123 // pred_fallthru
          _
      $region124: #{tpu_custom_call.1} parent=5 // pred_fallthru
        _
    $region6: #{tpu_custom_call.1} parent=1 // loop_footer
      %s37 = sadd.s32 1, %s33
    $region7: #{tpu_custom_call.1} parent=1 // loop_footer_branch
      %32 = sbr.rel target = $region3
    $region8: #{tpu_custom_call.1} parent=1 // loop_exit
      _
    %884 = vsyncpa [#allocation9], 1
    %s885 = scalar_lea.sflag [#allocation9], 1
    %886 = vsyncpa %s885, 1
    %887 = vsyncpa [#allocation12], 1
    %888 = vsyncpa [#allocation10], 1
    %s889 = scalar_lea.sflag [#allocation10], 1
    %890 = vsyncpa %s889, 1
  %891 = vsyncmov [#allocation4]
  %s892 = vpop.sfrf %891
  %p893 = scmp.eq.s32.totalorder %s892, 0
  %p894 = pneg %p893
  %896 = shalt.err (%p894)
  %s897 = scalar_lea.sflag [#allocation4], 1
  %898 = vsyncmov %s897
  %s899 = vpop.sfrf %898
  %p900 = scmp.eq.s32.totalorder %s899, 0
  %p901 = pneg %p900
  %903 = shalt.err (%p901)

</llo_original>
